<compile_context>
chip_gen: v6e
topology: v6e:2x2x1
jax: 0.10.0
libtpu: 0.0.40
codegen_flags: <defaults>
</compile_context>

<pallas_src>
import jax
import jax.numpy as jnp
from jax.experimental import pallas as pl
from jax.experimental.pallas import tpu as pltpu

D_IN, D_HID, D_OUT = 1000, 500, 65            # logical (PyTorch) dims
D_IN_P, D_HID_P, D_OUT_P = 1024, 512, 128     # (8,128)-aligned padded dims
TB_MAX = 256                                   # max batch-tile rows per grid step


def ssl_kernel(x_ref, w1_ref, b1_ref, w2_ref, b2_ref, o_ref):
    # Linear(1000, 500): bf16 operands on the MXU, f32 accumulation.
    h = jnp.dot(x_ref[...], w1_ref[...], preferred_element_type=jnp.float32)
    h = jnp.maximum(h + b1_ref[...], 0.0)      # bias + ReLU (padded cols stay 0)
    # Dropout(p=0.5) in eval mode == identity.
    # TODO(synk): training-mode stochastic dropout (pltpu.prng_seed / prng_random_bits).
    # Linear(500, 65): bf16 LHS, f32 accumulation, lane-dense 128-wide output store.
    out = jnp.dot(h.astype(jnp.bfloat16), w2_ref[...],
                  preferred_element_type=jnp.float32)
    o_ref[...] = (out + b2_ref[...]).astype(o_ref.dtype)


def prepare_params(w1, b1, w2, b2):
    """One-time prep: zero-pad to aligned dims, cast weights to bf16 (biases stay f32)."""
    w1p = jnp.zeros((D_IN_P, D_HID_P), jnp.float32).at[:D_IN, :D_HID].set(w1)
    b1p = jnp.zeros((1, D_HID_P), jnp.float32).at[:, :D_HID].set(b1)
    w2p = jnp.zeros((D_HID_P, D_OUT_P), jnp.float32).at[:D_HID, :D_OUT].set(w2)
    b2p = jnp.zeros((1, D_OUT_P), jnp.float32).at[:, :D_OUT].set(b2)
    return w1p.astype(jnp.bfloat16), b1p, w2p.astype(jnp.bfloat16), b2p


@jax.jit
def ssl_forward(x, w1p, b1p, w2p, b2p):
    B = x.shape[0]
    # Batch tile: whole (8-row-aligned) batch if small, else 256-row tiles.
    b_pad = -(-B // 8) * 8
    if b_pad <= TB_MAX:
        tb = b_pad
    else:
        tb = TB_MAX
        b_pad = -(-b_pad // tb) * tb
    # Zero-pad x to (b_pad, D_IN_P) and cast to bf16; padded rows/cols are inert.
    xp = jnp.zeros((b_pad, D_IN_P), jnp.bfloat16).at[:B, :D_IN].set(
        x.astype(jnp.bfloat16))

    out = pl.pallas_call(
        ssl_kernel,
        out_shape=jax.ShapeDtypeStruct((b_pad, D_OUT_P), jnp.float32),
        grid_spec=pltpu.PrefetchScalarGridSpec(
            num_scalar_prefetch=0,
            grid=(b_pad // tb,),
            in_specs=[
                pl.BlockSpec((tb, D_IN_P), lambda i: (i, 0)),          # x tile, pipelined
                pl.BlockSpec((D_IN_P, D_HID_P), lambda i: (0, 0)),     # W1 VMEM-resident
                pl.BlockSpec((1, D_HID_P), lambda i: (0, 0)),          # b1
                pl.BlockSpec((D_HID_P, D_OUT_P), lambda i: (0, 0)),    # W2 VMEM-resident
                pl.BlockSpec((1, D_OUT_P), lambda i: (0, 0)),          # b2
            ],
            out_specs=pl.BlockSpec((tb, D_OUT_P), lambda i: (i, 0)),
        ),
        compiler_params=pltpu.CompilerParams(
            dimension_semantics=("parallel",),
            vmem_limit_bytes=16 << 20,
        ),
    )(xp, w1p, b1p, w2p, b2p)
    return out[:B, :D_OUT]


def init_params(key):
    k1, k2, k3, k4 = jax.random.split(key, 4)
    # PyTorch-Linear-like uniform init (bound 1/sqrt(fan_in)), logical shapes, f32.
    bound1 = 1.0 / jnp.sqrt(D_IN)
    bound2 = 1.0 / jnp.sqrt(D_HID)
    w1 = jax.random.uniform(k1, (D_IN, D_HID), jnp.float32, -bound1, bound1)
    b1 = jax.random.uniform(k2, (1, D_HID), jnp.float32, -bound1, bound1)
    w2 = jax.random.uniform(k3, (D_HID, D_OUT), jnp.float32, -bound2, bound2)
    b2 = jax.random.uniform(k4, (1, D_OUT), jnp.float32, -bound2, bound2)
    return w1, b1, w2, b2


if __name__ == "__main__":
    key = jax.random.PRNGKey(0)
    kx, kp = jax.random.split(key)
    B = 8
    x = jax.random.normal(kx, (B, D_IN), jnp.float32)
    w1, b1, w2, b2 = init_params(kp)

    # One-time weight prep (pad + bf16 cast) — amortized across calls.
    w1p, b1p, w2p, b2p = prepare_params(w1, b1, w2, b2)

    out = jax.block_until_ready(ssl_forward(x, w1p, b1p, w2p, b2p))

    # Pure-JAX reference using the same bf16-rounded operands (f32 accumulation).
    xb = x.astype(jnp.bfloat16).astype(jnp.float32)
    w1b = w1.astype(jnp.bfloat16).astype(jnp.float32)
    w2b = w2.astype(jnp.bfloat16).astype(jnp.float32)
    h = jnp.maximum(xb @ w1b + b1, 0.0)
    ref = h.astype(jnp.bfloat16).astype(jnp.float32) @ w2b + b2

    assert out.shape == (B, D_OUT)
    assert jnp.allclose(out, ref, atol=1e-2, rtol=1e-2)
    print("KERNEL_OK")
</pallas_src>

<mosaic_0001>
module attributes {stable_mosaic.version = 11 : i64} {
  func.func @ssl_kernel(%arg0: i32, %arg1: memref<8x1024xbf16, #tpu.memory_space<vmem>>, %arg2: memref<1024x512xbf16, #tpu.memory_space<vmem>>, %arg3: memref<1x512xf32, #tpu.memory_space<vmem>>, %arg4: memref<512x128xbf16, #tpu.memory_space<vmem>>, %arg5: memref<1x128xf32, #tpu.memory_space<vmem>>, %arg6: memref<8x128xf32, #tpu.memory_space<vmem>>) attributes {dimension_semantics = [#tpu.dimension_semantics<parallel>], iteration_bounds = array<i64: 1>, scalar_prefetch = 0 : i64, scratch_operands = 0 : i64, tpu.core_type = #tpu.core_type<tc>, window_params = [{transform_indices = @transform_0, window_bounds = array<i64: 8, 1024>}, {pipeline_mode = #tpu.pipeline_mode<synchronous>, transform_indices = @transform_1, window_bounds = array<i64: 1024, 512>}, {pipeline_mode = #tpu.pipeline_mode<synchronous>, transform_indices = @transform_2, window_bounds = array<i64: 1, 512>}, {pipeline_mode = #tpu.pipeline_mode<synchronous>, transform_indices = @transform_3, window_bounds = array<i64: 512, 128>}, {pipeline_mode = #tpu.pipeline_mode<synchronous>, transform_indices = @transform_4, window_bounds = array<i64: 1, 128>}, {transform_indices = @transform_5, window_bounds = array<i64: 8, 128>}]} {
    %c0 = arith.constant 0 : index
    %c0_0 = arith.constant 0 : index
    %0 = vector.load %arg1[%c0, %c0_0] : memref<8x1024xbf16, #tpu.memory_space<vmem>>, vector<8x1024xbf16>
    %c0_1 = arith.constant 0 : index
    %c0_2 = arith.constant 0 : index
    %1 = vector.load %arg2[%c0_1, %c0_2] : memref<1024x512xbf16, #tpu.memory_space<vmem>>, vector<1024x512xbf16>
    %cst = arith.constant dense<0.000000e+00> : vector<8x512xf32>
    %2 = tpu.matmul %0, %1, %cst {dimension_numbers = #tpu.dot_dimension_numbers<[1], [0], [0], [1], [0, 0, 1, 1], [], []>} : vector<8x1024xbf16>, vector<1024x512xbf16>, vector<8x512xf32> -> vector<8x512xf32>
    %c0_3 = arith.constant 0 : index
    %c0_4 = arith.constant 0 : index
    %3 = vector.load %arg3[%c0_3, %c0_4] : memref<1x512xf32, #tpu.memory_space<vmem>>, vector<1x512xf32>
    %4 = vector.broadcast %3 : vector<1x512xf32> to vector<8x512xf32>
    %5 = arith.addf %2, %4 : vector<8x512xf32>
    %cst_5 = arith.constant 0.000000e+00 : f32
    %6 = vector.broadcast %cst_5 : f32 to vector<8x512xf32>
    %7 = arith.maximumf %5, %6 : vector<8x512xf32>
    %8 = arith.truncf %7 : vector<8x512xf32> to vector<8x512xbf16>
    %c0_6 = arith.constant 0 : index
    %c0_7 = arith.constant 0 : index
    %9 = vector.load %arg4[%c0_6, %c0_7] : memref<512x128xbf16, #tpu.memory_space<vmem>>, vector<512x128xbf16>
    %cst_8 = arith.constant dense<0.000000e+00> : vector<8x128xf32>
    %10 = tpu.matmul %8, %9, %cst_8 {dimension_numbers = #tpu.dot_dimension_numbers<[1], [0], [0], [1], [0, 0, 1, 1], [], []>} : vector<8x512xbf16>, vector<512x128xbf16>, vector<8x128xf32> -> vector<8x128xf32>
    %c0_9 = arith.constant 0 : index
    %c0_10 = arith.constant 0 : index
    %11 = vector.load %arg5[%c0_9, %c0_10] : memref<1x128xf32, #tpu.memory_space<vmem>>, vector<1x128xf32>
    %12 = vector.broadcast %11 : vector<1x128xf32> to vector<8x128xf32>
    %13 = arith.addf %10, %12 : vector<8x128xf32>
    %c0_11 = arith.constant 0 : index
    %c0_12 = arith.constant 0 : index
    %14 = vector.load %arg6[%c0_11, %c0_12] : memref<8x128xf32, #tpu.memory_space<vmem>>, vector<8x128xf32>
    tpu.vector_store %arg6[%c0_11, %c0_12], %13 {strides = array<i32>} : memref<8x128xf32, #tpu.memory_space<vmem>>, vector<8x128xf32>,
    return
  }
  func.func @transform_0(%arg0: i32) -> (i32, i32) {
    %c0_i32 = arith.constant 0 : i32
    %c0_i32_0 = arith.constant 0 : i32
    return %arg0, %c0_i32 : i32, i32
  }
  func.func @transform_1(%arg0: i32) -> (i32, i32) {
    %c0_i32 = arith.constant 0 : i32
    %c0_i32_0 = arith.constant 0 : i32
    %c0_i32_1 = arith.constant 0 : i32
    return %c0_i32, %c0_i32_0 : i32, i32
  }
  func.func @transform_2(%arg0: i32) -> (i32, i32) {
    %c0_i32 = arith.constant 0 : i32
    %c0_i32_0 = arith.constant 0 : i32
    %c0_i32_1 = arith.constant 0 : i32
    return %c0_i32, %c0_i32_0 : i32, i32
  }
  func.func @transform_3(%arg0: i32) -> (i32, i32) {
    %c0_i32 = arith.constant 0 : i32
    %c0_i32_0 = arith.constant 0 : i32
    %c0_i32_1 = arith.constant 0 : i32
    return %c0_i32, %c0_i32_0 : i32, i32
  }
  func.func @transform_4(%arg0: i32) -> (i32, i32) {
    %c0_i32 = arith.constant 0 : i32
    %c0_i32_0 = arith.constant 0 : i32
    %c0_i32_1 = arith.constant 0 : i32
    return %c0_i32, %c0_i32_0 : i32, i32
  }
  func.func @transform_5(%arg0: i32) -> (i32, i32) {
    %c0_i32 = arith.constant 0 : i32
    %c0_i32_0 = arith.constant 0 : i32
    return %arg0, %c0_i32 : i32, i32
  }
}

</mosaic_0001>

<llo_original>
// kernel: ssl_forward.1
$region0: #{ssl_forward.1}
  #allocation0 [shape = 'u32[]', space=smem, size = 0x4, offset = 0x4, fixed_abs, tag = 'smem constant byte address 0x4 - core index']
  #allocation1 [shape = 'u32[144,128]{1,0:T(1,128)}', space=vmem, size = 0x12000, scoped, tag = 'internal scratch']
  %s0 = inlined_call_operand.vmem [shape: bf16[8,1024], index: 0, kind: input, shape index: {}]
  %s1 = inlined_call_operand.hbm [shape: bf16[1024,512], index: 1, kind: input, shape index: {}]
  %s2 = inlined_call_operand.vmem [shape: f32[1,512], index: 2, kind: input, shape index: {}]
  %s3 = inlined_call_operand.hbm [shape: bf16[512,128], index: 3, kind: input, shape index: {}]
  %s4 = inlined_call_operand.vmem [shape: f32[1,128], index: 4, kind: input, shape index: {}]
  %s5 = inlined_call_operand.hbm [shape: f32[8,128], index: 5, kind: output, shape index: {}]
  %s6 = sld [smem:[#allocation0]]
  $region38: #{ssl_forward.1} parent=0
    _
  %s8 = ssub.s32 1, %s6
  %s9 = scalar_select 0, %s8, %s6
  $region1: #{ssl_forward.1} parent=0
    #allocation2 [shape = 'u8[1048576]{0}', space=vmem, size = 0x100000, scoped, tag = 'input window, operand 1, single buffered']
    #allocation3 [shape = 's32[1]{0}', space=sflag, size = 0x4, scoped, tag = 'scoped memory for ssl_forward.1']
    #allocation4 [shape = 's32[1]{0}', space=sflag, size = 0x4, scoped, tag = 'scoped memory for ssl_forward.1']
    #allocation5 [shape = 'u8[131072]{0}', space=vmem, size = 0x20000, scoped, tag = 'input window, operand 3, single buffered']
    #allocation6 [shape = 's32[1]{0}', space=sflag, size = 0x4, scoped, tag = 'scoped memory for ssl_forward.1']
    #allocation7 [shape = 'u8[4096]{0}', space=vmem, size = 0x1000, scoped, tag = 'output window, operand 0, single buffered']
    %10 = vsyncpa [#allocation3], 0
    %11 = vsyncpa [#allocation6], 0
    %12 = vsyncpa [#allocation4], 0
    // Predicated region
    $region2: #{ssl_forward.1} parent=1 // pred_check
      _
    $region3: #{ssl_forward.1} parent=1 // pred_check_branch
      %14 = sbr.rel (0) target = $region5
    $region4: #{ssl_forward.1} parent=1 // pred_region
      _
    $region5: #{ssl_forward.1} parent=1 // pred_fallthru
      _
    // Predicated region
    $region6: #{ssl_forward.1} parent=1 // pred_check
      _
    $region7: #{ssl_forward.1} parent=1 // pred_check_branch
      %16 = sbr.rel (0) target = $region9
    $region8: #{ssl_forward.1} parent=1 // pred_region
      %s18 = ssub.s32 32768, 32768
      %19 = vsyncadd [#allocation3], %s18
      %s20 = sshll.u32 [#allocation2], 4
      %s21 = int_to_ptr.vmem [resolvable:$true] %s20
      %26 = dma.hbm_to_vmem [thread:$0]  %s1, 32768, %s21, [#allocation3], 256, 256, 16
    $region9: #{ssl_forward.1} parent=1 // pred_fallthru
      _
    // Predicated region
    $region10: #{ssl_forward.1} parent=1 // pred_check
      _
    $region11: #{ssl_forward.1} parent=1 // pred_check_branch
      %28 = sbr.rel (0) target = $region13
    $region12: #{ssl_forward.1} parent=1 // pred_region
      _
    $region13: #{ssl_forward.1} parent=1 // pred_fallthru
      _
    // Predicated region
    $region14: #{ssl_forward.1} parent=1 // pred_check
      _
    $region15: #{ssl_forward.1} parent=1 // pred_check_branch
      %30 = sbr.rel (0) target = $region17
    $region16: #{ssl_forward.1} parent=1 // pred_region
      %s32 = ssub.s32 4096, 4096
      %33 = vsyncadd [#allocation6], %s32
      %s34 = sshll.u32 [#allocation5], 4
      %s35 = int_to_ptr.vmem [resolvable:$true] %s34
      %40 = dma.hbm_to_vmem [thread:$0]  %s3, 4096, %s35, [#allocation6], 64, 64, 4
    $region17: #{ssl_forward.1} parent=1 // pred_fallthru
      _
    // Predicated region
    $region18: #{ssl_forward.1} parent=1 // pred_check
      _
    $region19: #{ssl_forward.1} parent=1 // pred_check_branch
      %42 = sbr.rel (0) target = $region21
    $region20: #{ssl_forward.1} parent=1 // pred_region
      _
    $region21: #{ssl_forward.1} parent=1 // pred_fallthru
      _
    // Predicated region
    $region22: #{ssl_forward.1} parent=1 // pred_check
      _
    $region23: #{ssl_forward.1} parent=1 // pred_check_branch
      %44 = sbr.rel (0) target = $region25
    $region24: #{ssl_forward.1} parent=1 // pred_region
      %45 = dma.done [#allocation3], 32768
    $region25: #{ssl_forward.1} parent=1 // pred_fallthru
      _
    // Predicated region
    $region26: #{ssl_forward.1} parent=1 // pred_check
      _
    $region27: #{ssl_forward.1} parent=1 // pred_check_branch
      %47 = sbr.rel (0) target = $region29
    $region28: #{ssl_forward.1} parent=1 // pred_region
      %48 = dma.done [#allocation6], 4096
    $region29: #{ssl_forward.1} parent=1 // pred_fallthru
      _
    %v50 = vld [vmem:[%s0] sm:$0xff]
    %v51 = vld [vmem:[%s0 + $0x8] sm:$0xff]
    %v52 = vld [vmem:[%s0 + $0x10] sm:$0xff]
    %v53 = vld [vmem:[%s0 + $0x18] sm:$0xff]
    %v54 = vld [vmem:[#allocation2] sm:$0xff]
    %v55 = vld [vmem:[#allocation2 + $0x8] sm:$0xff]
    %v56 = vld [vmem:[#allocation2 + $0x10] sm:$0xff]
    %v57 = vld [vmem:[#allocation2 + $0x18] sm:$0xff]
    %v58 = vld [vmem:[#allocation2 + $0x20] sm:$0xff]
    %v59 = vld [vmem:[#allocation2 + $0x28] sm:$0xff]
    %v60 = vld [vmem:[#allocation2 + $0x30] sm:$0xff]
    %v61 = vld [vmem:[#allocation2 + $0x38] sm:$0xff]
    %v62 = vld [vmem:[#allocation2 + $0x40] sm:$0xff]
    %v63 = vld [vmem:[#allocation2 + $0x48] sm:$0xff]
    %v64 = vld [vmem:[#allocation2 + $0x50] sm:$0xff]
    %v65 = vld [vmem:[#allocation2 + $0x58] sm:$0xff]
    %v66 = vld [vmem:[#allocation2 + $0x60] sm:$0xff]
    %v67 = vld [vmem:[#allocation2 + $0x68] sm:$0xff]
    %v68 = vld [vmem:[#allocation2 + $0x70] sm:$0xff]
    %v69 = vld [vmem:[#allocation2 + $0x78] sm:$0xff]
    %v70 = vld [vmem:[#allocation2 + $0x80] sm:$0xff]
    %v71 = vld [vmem:[#allocation2 + $0x88] sm:$0xff]
    %v72 = vld [vmem:[#allocation2 + $0x90] sm:$0xff]
    %v73 = vld [vmem:[#allocation2 + $0x98] sm:$0xff]
    %v74 = vld [vmem:[#allocation2 + $0xa0] sm:$0xff]
    %v75 = vld [vmem:[#allocation2 + $0xa8] sm:$0xff]
    %v76 = vld [vmem:[#allocation2 + $0xb0] sm:$0xff]
    %v77 = vld [vmem:[#allocation2 + $0xb8] sm:$0xff]
    %v78 = vld [vmem:[#allocation2 + $0xc0] sm:$0xff]
    %v79 = vld [vmem:[#allocation2 + $0xc8] sm:$0xff]
    %v80 = vld [vmem:[#allocation2 + $0xd0] sm:$0xff]
    %v81 = vld [vmem:[#allocation2 + $0xd8] sm:$0xff]
    %v82 = vld [vmem:[#allocation2 + $0xe0] sm:$0xff]
    %v83 = vld [vmem:[#allocation2 + $0xe8] sm:$0xff]
    %v84 = vld [vmem:[#allocation2 + $0xf0] sm:$0xff]
    %v85 = vld [vmem:[#allocation2 + $0xf8] sm:$0xff]
    %v86 = vld [vmem:[#allocation2 + $0x100] sm:$0xff]
    %v87 = vld [vmem:[#allocation2 + $0x108] sm:$0xff]
    %v88 = vld [vmem:[#allocation2 + $0x110] sm:$0xff]
    %v89 = vld [vmem:[#allocation2 + $0x118] sm:$0xff]
    %v90 = vld [vmem:[#allocation2 + $0x120] sm:$0xff]
    %v91 = vld [vmem:[#allocation2 + $0x128] sm:$0xff]
    %v92 = vld [vmem:[#allocation2 + $0x130] sm:$0xff]
    %v93 = vld [vmem:[#allocation2 + $0x138] sm:$0xff]
    %v94 = vld [vmem:[#allocation2 + $0x140] sm:$0xff]
    %v95 = vld [vmem:[#allocation2 + $0x148] sm:$0xff]
    %v96 = vld [vmem:[#allocation2 + $0x150] sm:$0xff]
    %v97 = vld [vmem:[#allocation2 + $0x158] sm:$0xff]
    %v98 = vld [vmem:[#allocation2 + $0x160] sm:$0xff]
    %v99 = vld [vmem:[#allocation2 + $0x168] sm:$0xff]
    %v100 = vld [vmem:[#allocation2 + $0x170] sm:$0xff]
    %v101 = vld [vmem:[#allocation2 + $0x178] sm:$0xff]
    %v102 = vld [vmem:[#allocation2 + $0x180] sm:$0xff]
    %v103 = vld [vmem:[#allocation2 + $0x188] sm:$0xff]
    %v104 = vld [vmem:[#allocation2 + $0x190] sm:$0xff]
    %v105 = vld [vmem:[#allocation2 + $0x198] sm:$0xff]
    %v106 = vld [vmem:[#allocation2 + $0x1a0] sm:$0xff]
    %v107 = vld [vmem:[#allocation2 + $0x1a8] sm:$0xff]
    %v108 = vld [vmem:[#allocation2 + $0x1b0] sm:$0xff]
    %v109 = vld [vmem:[#allocation2 + $0x1b8] sm:$0xff]
    %v110 = vld [vmem:[#allocation2 + $0x1c0] sm:$0xff]
    %v111 = vld [vmem:[#allocation2 + $0x1c8] sm:$0xff]
    %v112 = vld [vmem:[#allocation2 + $0x1d0] sm:$0xff]
    %v113 = vld [vmem:[#allocation2 + $0x1d8] sm:$0xff]
    %v114 = vld [vmem:[#allocation2 + $0x1e0] sm:$0xff]
    %v115 = vld [vmem:[#allocation2 + $0x1e8] sm:$0xff]
    %v116 = vld [vmem:[#allocation2 + $0x1f0] sm:$0xff]
    %v117 = vld [vmem:[#allocation2 + $0x1f8] sm:$0xff]
    %v118 = vld [vmem:[#allocation2 + $0x200] sm:$0xff]
    %v119 = vld [vmem:[#allocation2 + $0x208] sm:$0xff]
    %v120 = vld [vmem:[#allocation2 + $0x210] sm:$0xff]
    %v121 = vld [vmem:[#allocation2 + $0x218] sm:$0xff]
    %v122 = vld [vmem:[#allocation2 + $0x220] sm:$0xff]
    %v123 = vld [vmem:[#allocation2 + $0x228] sm:$0xff]
    %v124 = vld [vmem:[#allocation2 + $0x230] sm:$0xff]
    %v125 = vld [vmem:[#allocation2 + $0x238] sm:$0xff]
    %v126 = vld [vmem:[#allocation2 + $0x240] sm:$0xff]
    %v127 = vld [vmem:[#allocation2 + $0x248] sm:$0xff]
    %v128 = vld [vmem:[#allocation2 + $0x250] sm:$0xff]
    %v129 = vld [vmem:[#allocation2 + $0x258] sm:$0xff]
    %v130 = vld [vmem:[#allocation2 + $0x260] sm:$0xff]
    %v131 = vld [vmem:[#allocation2 + $0x268] sm:$0xff]
    %v132 = vld [vmem:[#allocation2 + $0x270] sm:$0xff]
    %v133 = vld [vmem:[#allocation2 + $0x278] sm:$0xff]
    %v134 = vld [vmem:[#allocation2 + $0x280] sm:$0xff]
    %v135 = vld [vmem:[#allocation2 + $0x288] sm:$0xff]
    %v136 = vld [vmem:[#allocation2 + $0x290] sm:$0xff]
    %v137 = vld [vmem:[#allocation2 + $0x298] sm:$0xff]
    %v138 = vld [vmem:[#allocation2 + $0x2a0] sm:$0xff]
    %v139 = vld [vmem:[#allocation2 + $0x2a8] sm:$0xff]
    %v140 = vld [vmem:[#allocation2 + $0x2b0] sm:$0xff]
    %v141 = vld [vmem:[#allocation2 + $0x2b8] sm:$0xff]
    %v142 = vld [vmem:[#allocation2 + $0x2c0] sm:$0xff]
    %v143 = vld [vmem:[#allocation2 + $0x2c8] sm:$0xff]
    %v144 = vld [vmem:[#allocation2 + $0x2d0] sm:$0xff]
    %v145 = vld [vmem:[#allocation2 + $0x2d8] sm:$0xff]
    %v146 = vld [vmem:[#allocation2 + $0x2e0] sm:$0xff]
    %v147 = vld [vmem:[#allocation2 + $0x2e8] sm:$0xff]
    %v148 = vld [vmem:[#allocation2 + $0x2f0] sm:$0xff]
    %v149 = vld [vmem:[#allocation2 + $0x2f8] sm:$0xff]
    %v150 = vld [vmem:[#allocation2 + $0x300] sm:$0xff]
    %v151 = vld [vmem:[#allocation2 + $0x308] sm:$0xff]
    %v152 = vld [vmem:[#allocation2 + $0x310] sm:$0xff]
    %v153 = vld [vmem:[#allocation2 + $0x318] sm:$0xff]
    %v154 = vld [vmem:[#allocation2 + $0x320] sm:$0xff]
    %v155 = vld [vmem:[#allocation2 + $0x328] sm:$0xff]
    %v156 = vld [vmem:[#allocation2 + $0x330] sm:$0xff]
    %v157 = vld [vmem:[#allocation2 + $0x338] sm:$0xff]
    %v158 = vld [vmem:[#allocation2 + $0x340] sm:$0xff]
    %v159 = vld [vmem:[#allocation2 + $0x348] sm:$0xff]
    %v160 = vld [vmem:[#allocation2 + $0x350] sm:$0xff]
    %v161 = vld [vmem:[#allocation2 + $0x358] sm:$0xff]
    %v162 = vld [vmem:[#allocation2 + $0x360] sm:$0xff]
    %v163 = vld [vmem:[#allocation2 + $0x368] sm:$0xff]
    %v164 = vld [vmem:[#allocation2 + $0x370] sm:$0xff]
    %v165 = vld [vmem:[#allocation2 + $0x378] sm:$0xff]
    %v166 = vld [vmem:[#allocation2 + $0x380] sm:$0xff]
    %v167 = vld [vmem:[#allocation2 + $0x388] sm:$0xff]
    %v168 = vld [vmem:[#allocation2 + $0x390] sm:$0xff]
    %v169 = vld [vmem:[#allocation2 + $0x398] sm:$0xff]
    %v170 = vld [vmem:[#allocation2 + $0x3a0] sm:$0xff]
    %v171 = vld [vmem:[#allocation2 + $0x3a8] sm:$0xff]
    %v172 = vld [vmem:[#allocation2 + $0x3b0] sm:$0xff]
    %v173 = vld [vmem:[#allocation2 + $0x3b8] sm:$0xff]
    %v174 = vld [vmem:[#allocation2 + $0x3c0] sm:$0xff]
    %v175 = vld [vmem:[#allocation2 + $0x3c8] sm:$0xff]
    %v176 = vld [vmem:[#allocation2 + $0x3d0] sm:$0xff]
    %v177 = vld [vmem:[#allocation2 + $0x3d8] sm:$0xff]
    %v178 = vld [vmem:[#allocation2 + $0x3e0] sm:$0xff]
    %v179 = vld [vmem:[#allocation2 + $0x3e8] sm:$0xff]
    %v180 = vld [vmem:[#allocation2 + $0x3f0] sm:$0xff]
    %v181 = vld [vmem:[#allocation2 + $0x3f8] sm:$0xff]
    %v182 = vld [vmem:[#allocation2 + $0x400] sm:$0xff]
    %v183 = vld [vmem:[#allocation2 + $0x408] sm:$0xff]
    %v184 = vld [vmem:[#allocation2 + $0x410] sm:$0xff]
    %v185 = vld [vmem:[#allocation2 + $0x418] sm:$0xff]
    %v186 = vld [vmem:[#allocation2 + $0x420] sm:$0xff]
    %v187 = vld [vmem:[#allocation2 + $0x428] sm:$0xff]
    %v188 = vld [vmem:[#allocation2 + $0x430] sm:$0xff]
    %v189 = vld [vmem:[#allocation2 + $0x438] sm:$0xff]
    %v190 = vld [vmem:[#allocation2 + $0x440] sm:$0xff]
    %v191 = vld [vmem:[#allocation2 + $0x448] sm:$0xff]
    %v192 = vld [vmem:[#allocation2 + $0x450] sm:$0xff]
    %v193 = vld [vmem:[#allocation2 + $0x458] sm:$0xff]
    %v194 = vld [vmem:[#allocation2 + $0x460] sm:$0xff]
    %v195 = vld [vmem:[#allocation2 + $0x468] sm:$0xff]
    %v196 = vld [vmem:[#allocation2 + $0x470] sm:$0xff]
    %v197 = vld [vmem:[#allocation2 + $0x478] sm:$0xff]
    %v198 = vld [vmem:[#allocation2 + $0x480] sm:$0xff]
    %v199 = vld [vmem:[#allocation2 + $0x488] sm:$0xff]
    %v200 = vld [vmem:[#allocation2 + $0x490] sm:$0xff]
    %v201 = vld [vmem:[#allocation2 + $0x498] sm:$0xff]
    %v202 = vld [vmem:[#allocation2 + $0x4a0] sm:$0xff]
    %v203 = vld [vmem:[#allocation2 + $0x4a8] sm:$0xff]
    %v204 = vld [vmem:[#allocation2 + $0x4b0] sm:$0xff]
    %v205 = vld [vmem:[#allocation2 + $0x4b8] sm:$0xff]
    %v206 = vld [vmem:[#allocation2 + $0x4c0] sm:$0xff]
    %v207 = vld [vmem:[#allocation2 + $0x4c8] sm:$0xff]
    %v208 = vld [vmem:[#allocation2 + $0x4d0] sm:$0xff]
    %v209 = vld [vmem:[#allocation2 + $0x4d8] sm:$0xff]
    %v210 = vld [vmem:[#allocation2 + $0x4e0] sm:$0xff]
    %v211 = vld [vmem:[#allocation2 + $0x4e8] sm:$0xff]
    %v212 = vld [vmem:[#allocation2 + $0x4f0] sm:$0xff]
    %v213 = vld [vmem:[#allocation2 + $0x4f8] sm:$0xff]
    %v214 = vld [vmem:[#allocation2 + $0x500] sm:$0xff]
    %v215 = vld [vmem:[#allocation2 + $0x508] sm:$0xff]
    %v216 = vld [vmem:[#allocation2 + $0x510] sm:$0xff]
    %v217 = vld [vmem:[#allocation2 + $0x518] sm:$0xff]
    %v218 = vld [vmem:[#allocation2 + $0x520] sm:$0xff]
    %v219 = vld [vmem:[#allocation2 + $0x528] sm:$0xff]
    %v220 = vld [vmem:[#allocation2 + $0x530] sm:$0xff]
    %v221 = vld [vmem:[#allocation2 + $0x538] sm:$0xff]
    %v222 = vld [vmem:[#allocation2 + $0x540] sm:$0xff]
    %v223 = vld [vmem:[#allocation2 + $0x548] sm:$0xff]
    %v224 = vld [vmem:[#allocation2 + $0x550] sm:$0xff]
    %v225 = vld [vmem:[#allocation2 + $0x558] sm:$0xff]
    %v226 = vld [vmem:[#allocation2 + $0x560] sm:$0xff]
    %v227 = vld [vmem:[#allocation2 + $0x568] sm:$0xff]
    %v228 = vld [vmem:[#allocation2 + $0x570] sm:$0xff]
    %v229 = vld [vmem:[#allocation2 + $0x578] sm:$0xff]
    %v230 = vld [vmem:[#allocation2 + $0x580] sm:$0xff]
    %v231 = vld [vmem:[#allocation2 + $0x588] sm:$0xff]
    %v232 = vld [vmem:[#allocation2 + $0x590] sm:$0xff]
    %v233 = vld [vmem:[#allocation2 + $0x598] sm:$0xff]
    %v234 = vld [vmem:[#allocation2 + $0x5a0] sm:$0xff]
    %v235 = vld [vmem:[#allocation2 + $0x5a8] sm:$0xff]
    %v236 = vld [vmem:[#allocation2 + $0x5b0] sm:$0xff]
    %v237 = vld [vmem:[#allocation2 + $0x5b8] sm:$0xff]
    %v238 = vld [vmem:[#allocation2 + $0x5c0] sm:$0xff]
    %v239 = vld [vmem:[#allocation2 + $0x5c8] sm:$0xff]
    %v240 = vld [vmem:[#allocation2 + $0x5d0] sm:$0xff]
    %v241 = vld [vmem:[#allocation2 + $0x5d8] sm:$0xff]
    %v242 = vld [vmem:[#allocation2 + $0x5e0] sm:$0xff]
    %v243 = vld [vmem:[#allocation2 + $0x5e8] sm:$0xff]
    %v244 = vld [vmem:[#allocation2 + $0x5f0] sm:$0xff]
    %v245 = vld [vmem:[#allocation2 + $0x5f8] sm:$0xff]
    %v246 = vld [vmem:[#allocation2 + $0x600] sm:$0xff]
    %v247 = vld [vmem:[#allocation2 + $0x608] sm:$0xff]
    %v248 = vld [vmem:[#allocation2 + $0x610] sm:$0xff]
    %v249 = vld [vmem:[#allocation2 + $0x618] sm:$0xff]
    %v250 = vld [vmem:[#allocation2 + $0x620] sm:$0xff]
    %v251 = vld [vmem:[#allocation2 + $0x628] sm:$0xff]
    %v252 = vld [vmem:[#allocation2 + $0x630] sm:$0xff]
    %v253 = vld [vmem:[#allocation2 + $0x638] sm:$0xff]
    %v254 = vld [vmem:[#allocation2 + $0x640] sm:$0xff]
    %v255 = vld [vmem:[#allocation2 + $0x648] sm:$0xff]
    %v256 = vld [vmem:[#allocation2 + $0x650] sm:$0xff]
    %v257 = vld [vmem:[#allocation2 + $0x658] sm:$0xff]
    %v258 = vld [vmem:[#allocation2 + $0x660] sm:$0xff]
    %v259 = vld [vmem:[#allocation2 + $0x668] sm:$0xff]
    %v260 = vld [vmem:[#allocation2 + $0x670] sm:$0xff]
    %v261 = vld [vmem:[#allocation2 + $0x678] sm:$0xff]
    %v262 = vld [vmem:[#allocation2 + $0x680] sm:$0xff]
    %v263 = vld [vmem:[#allocation2 + $0x688] sm:$0xff]
    %v264 = vld [vmem:[#allocation2 + $0x690] sm:$0xff]
    %v265 = vld [vmem:[#allocation2 + $0x698] sm:$0xff]
    %v266 = vld [vmem:[#allocation2 + $0x6a0] sm:$0xff]
    %v267 = vld [vmem:[#allocation2 + $0x6a8] sm:$0xff]
    %v268 = vld [vmem:[#allocation2 + $0x6b0] sm:$0xff]
    %v269 = vld [vmem:[#allocation2 + $0x6b8] sm:$0xff]
    %v270 = vld [vmem:[#allocation2 + $0x6c0] sm:$0xff]
    %v271 = vld [vmem:[#allocation2 + $0x6c8] sm:$0xff]
    %v272 = vld [vmem:[#allocation2 + $0x6d0] sm:$0xff]
    %v273 = vld [vmem:[#allocation2 + $0x6d8] sm:$0xff]
    %v274 = vld [vmem:[#allocation2 + $0x6e0] sm:$0xff]
    %v275 = vld [vmem:[#allocation2 + $0x6e8] sm:$0xff]
    %v276 = vld [vmem:[#allocation2 + $0x6f0] sm:$0xff]
    %v277 = vld [vmem:[#allocation2 + $0x6f8] sm:$0xff]
    %v278 = vld [vmem:[#allocation2 + $0x700] sm:$0xff]
    %v279 = vld [vmem:[#allocation2 + $0x708] sm:$0xff]
    %v280 = vld [vmem:[#allocation2 + $0x710] sm:$0xff]
    %v281 = vld [vmem:[#allocation2 + $0x718] sm:$0xff]
    %v282 = vld [vmem:[#allocation2 + $0x720] sm:$0xff]
    %v283 = vld [vmem:[#allocation2 + $0x728] sm:$0xff]
    %v284 = vld [vmem:[#allocation2 + $0x730] sm:$0xff]
    %v285 = vld [vmem:[#allocation2 + $0x738] sm:$0xff]
    %v286 = vld [vmem:[#allocation2 + $0x740] sm:$0xff]
    %v287 = vld [vmem:[#allocation2 + $0x748] sm:$0xff]
    %v288 = vld [vmem:[#allocation2 + $0x750] sm:$0xff]
    %v289 = vld [vmem:[#allocation2 + $0x758] sm:$0xff]
    %v290 = vld [vmem:[#allocation2 + $0x760] sm:$0xff]
    %v291 = vld [vmem:[#allocation2 + $0x768] sm:$0xff]
    %v292 = vld [vmem:[#allocation2 + $0x770] sm:$0xff]
    %v293 = vld [vmem:[#allocation2 + $0x778] sm:$0xff]
    %v294 = vld [vmem:[#allocation2 + $0x780] sm:$0xff]
    %v295 = vld [vmem:[#allocation2 + $0x788] sm:$0xff]
    %v296 = vld [vmem:[#allocation2 + $0x790] sm:$0xff]
    %v297 = vld [vmem:[#allocation2 + $0x798] sm:$0xff]
    %v298 = vld [vmem:[#allocation2 + $0x7a0] sm:$0xff]
    %v299 = vld [vmem:[#allocation2 + $0x7a8] sm:$0xff]
    %v300 = vld [vmem:[#allocation2 + $0x7b0] sm:$0xff]
    %v301 = vld [vmem:[#allocation2 + $0x7b8] sm:$0xff]
    %v302 = vld [vmem:[#allocation2 + $0x7c0] sm:$0xff]
    %v303 = vld [vmem:[#allocation2 + $0x7c8] sm:$0xff]
    %v304 = vld [vmem:[#allocation2 + $0x7d0] sm:$0xff]
    %v305 = vld [vmem:[#allocation2 + $0x7d8] sm:$0xff]
    %v306 = vld [vmem:[#allocation2 + $0x7e0] sm:$0xff]
    %v307 = vld [vmem:[#allocation2 + $0x7e8] sm:$0xff]
    %v308 = vld [vmem:[#allocation2 + $0x7f0] sm:$0xff]
    %v309 = vld [vmem:[#allocation2 + $0x7f8] sm:$0xff]
    %v310 = vld [vmem:[%s2] sm:$0xf]
    %v312 = vlaneseq
    %v313 = vshrl.u32 %v312, 7
    %v314 = vsub.s32 0, %v313
    %v315 = vrot.slane %v310, %v314
    %v316 = vlaneseq
    %v317 = vshrl.u32 %v316, 7
    %v318 = vsub.s32 1, %v317
    %v319 = vrot.slane %v310, %v318
    %v320 = vlaneseq
    %v321 = vshrl.u32 %v320, 7
    %v322 = vsub.s32 2, %v321
    %v323 = vrot.slane %v310, %v322
    %v324 = vlaneseq
    %v325 = vshrl.u32 %v324, 7
    %v326 = vsub.s32 3, %v325
    %v327 = vrot.slane %v310, %v326
    %v336 = vunpack.c.l.b16 %v50
    %v337 = vunpack.c.h.b16 %v50
    %v338 = vunpack.c.l.b16 %v51
    %v339 = vunpack.c.h.b16 %v51
    %v340 = vunpack.c.l.b16 %v52
    %v341 = vunpack.c.h.b16 %v52
    %v342 = vunpack.c.l.b16 %v53
    %v343 = vunpack.c.h.b16 %v53
    %v344 = vpack.c.b16 %v336, %v336
    %v345 = vpack.c.b16 %v337, %v337
    %v346 = vpack.c.b16 %v338, %v338
    %v347 = vpack.c.b16 %v339, %v339
    %v348 = vpack.c.b16 %v340, %v340
    %v349 = vpack.c.b16 %v341, %v341
    %v350 = vpack.c.b16 %v342, %v342
    %v351 = vpack.c.b16 %v343, %v343
    %v616 = vunpack.c.l.b16 %v54
    %v617 = vunpack.c.h.b16 %v54
    %v618 = vunpack.c.l.b16 %v55
    %v619 = vunpack.c.h.b16 %v55
    %v620 = vunpack.c.l.b16 %v56
    %v621 = vunpack.c.h.b16 %v56
    %v622 = vunpack.c.l.b16 %v57
    %v623 = vunpack.c.h.b16 %v57
    %v624 = vunpack.c.l.b16 %v58
    %v625 = vunpack.c.h.b16 %v58
    %v626 = vunpack.c.l.b16 %v59
    %v627 = vunpack.c.h.b16 %v59
    %v628 = vunpack.c.l.b16 %v60
    %v629 = vunpack.c.h.b16 %v60
    %v630 = vunpack.c.l.b16 %v61
    %v631 = vunpack.c.h.b16 %v61
    %v632 = vunpack.c.l.b16 %v62
    %v633 = vunpack.c.h.b16 %v62
    %v634 = vunpack.c.l.b16 %v63
    %v635 = vunpack.c.h.b16 %v63
    %v636 = vunpack.c.l.b16 %v64
    %v637 = vunpack.c.h.b16 %v64
    %v638 = vunpack.c.l.b16 %v65
    %v639 = vunpack.c.h.b16 %v65
    %v640 = vunpack.c.l.b16 %v66
    %v641 = vunpack.c.h.b16 %v66
    %v642 = vunpack.c.l.b16 %v67
    %v643 = vunpack.c.h.b16 %v67
    %v644 = vunpack.c.l.b16 %v68
    %v645 = vunpack.c.h.b16 %v68
    %v646 = vunpack.c.l.b16 %v69
    %v647 = vunpack.c.h.b16 %v69
    %v648 = vunpack.c.l.b16 %v70
    %v649 = vunpack.c.h.b16 %v70
    %v650 = vunpack.c.l.b16 %v71
    %v651 = vunpack.c.h.b16 %v71
    %v652 = vunpack.c.l.b16 %v72
    %v653 = vunpack.c.h.b16 %v72
    %v654 = vunpack.c.l.b16 %v73
    %v655 = vunpack.c.h.b16 %v73
    %v656 = vunpack.c.l.b16 %v74
    %v657 = vunpack.c.h.b16 %v74
    %v658 = vunpack.c.l.b16 %v75
    %v659 = vunpack.c.h.b16 %v75
    %v660 = vunpack.c.l.b16 %v76
    %v661 = vunpack.c.h.b16 %v76
    %v662 = vunpack.c.l.b16 %v77
    %v663 = vunpack.c.h.b16 %v77
    %v664 = vunpack.c.l.b16 %v78
    %v665 = vunpack.c.h.b16 %v78
    %v666 = vunpack.c.l.b16 %v79
    %v667 = vunpack.c.h.b16 %v79
    %v668 = vunpack.c.l.b16 %v80
    %v669 = vunpack.c.h.b16 %v80
    %v670 = vunpack.c.l.b16 %v81
    %v671 = vunpack.c.h.b16 %v81
    %v672 = vunpack.c.l.b16 %v82
    %v673 = vunpack.c.h.b16 %v82
    %v674 = vunpack.c.l.b16 %v83
    %v675 = vunpack.c.h.b16 %v83
    %v676 = vunpack.c.l.b16 %v84
    %v677 = vunpack.c.h.b16 %v84
    %v678 = vunpack.c.l.b16 %v85
    %v679 = vunpack.c.h.b16 %v85
    %v680 = vunpack.c.l.b16 %v86
    %v681 = vunpack.c.h.b16 %v86
    %v682 = vunpack.c.l.b16 %v87
    %v683 = vunpack.c.h.b16 %v87
    %v684 = vunpack.c.l.b16 %v88
    %v685 = vunpack.c.h.b16 %v88
    %v686 = vunpack.c.l.b16 %v89
    %v687 = vunpack.c.h.b16 %v89
    %v688 = vunpack.c.l.b16 %v90
    %v689 = vunpack.c.h.b16 %v90
    %v690 = vunpack.c.l.b16 %v91
    %v691 = vunpack.c.h.b16 %v91
    %v692 = vunpack.c.l.b16 %v92
    %v693 = vunpack.c.h.b16 %v92
    %v694 = vunpack.c.l.b16 %v93
    %v695 = vunpack.c.h.b16 %v93
    %v696 = vunpack.c.l.b16 %v94
    %v697 = vunpack.c.h.b16 %v94
    %v698 = vunpack.c.l.b16 %v95
    %v699 = vunpack.c.h.b16 %v95
    %v700 = vunpack.c.l.b16 %v96
    %v701 = vunpack.c.h.b16 %v96
    %v702 = vunpack.c.l.b16 %v97
    %v703 = vunpack.c.h.b16 %v97
    %v704 = vunpack.c.l.b16 %v98
    %v705 = vunpack.c.h.b16 %v98
    %v706 = vunpack.c.l.b16 %v99
    %v707 = vunpack.c.h.b16 %v99
    %v708 = vunpack.c.l.b16 %v100
    %v709 = vunpack.c.h.b16 %v100
    %v710 = vunpack.c.l.b16 %v101
    %v711 = vunpack.c.h.b16 %v101
    %v712 = vunpack.c.l.b16 %v102
    %v713 = vunpack.c.h.b16 %v102
    %v714 = vunpack.c.l.b16 %v103
    %v715 = vunpack.c.h.b16 %v103
    %v716 = vunpack.c.l.b16 %v104
    %v717 = vunpack.c.h.b16 %v104
    %v718 = vunpack.c.l.b16 %v105
    %v719 = vunpack.c.h.b16 %v105
    %v720 = vunpack.c.l.b16 %v106
    %v721 = vunpack.c.h.b16 %v106
    %v722 = vunpack.c.l.b16 %v107
    %v723 = vunpack.c.h.b16 %v107
    %v724 = vunpack.c.l.b16 %v108
    %v725 = vunpack.c.h.b16 %v108
    %v726 = vunpack.c.l.b16 %v109
    %v727 = vunpack.c.h.b16 %v109
    %v728 = vunpack.c.l.b16 %v110
    %v729 = vunpack.c.h.b16 %v110
    %v730 = vunpack.c.l.b16 %v111
    %v731 = vunpack.c.h.b16 %v111
    %v732 = vunpack.c.l.b16 %v112
    %v733 = vunpack.c.h.b16 %v112
    %v734 = vunpack.c.l.b16 %v113
    %v735 = vunpack.c.h.b16 %v113
    %v736 = vunpack.c.l.b16 %v114
    %v737 = vunpack.c.h.b16 %v114
    %v738 = vunpack.c.l.b16 %v115
    %v739 = vunpack.c.h.b16 %v115
    %v740 = vunpack.c.l.b16 %v116
    %v741 = vunpack.c.h.b16 %v116
    %v742 = vunpack.c.l.b16 %v117
    %v743 = vunpack.c.h.b16 %v117
    %v744 = vunpack.c.l.b16 %v118
    %v745 = vunpack.c.h.b16 %v118
    %v746 = vunpack.c.l.b16 %v119
    %v747 = vunpack.c.h.b16 %v119
    %v748 = vunpack.c.l.b16 %v120
    %v749 = vunpack.c.h.b16 %v120
    %v750 = vunpack.c.l.b16 %v121
    %v751 = vunpack.c.h.b16 %v121
    %v752 = vunpack.c.l.b16 %v122
    %v753 = vunpack.c.h.b16 %v122
    %v754 = vunpack.c.l.b16 %v123
    %v755 = vunpack.c.h.b16 %v123
    %v756 = vunpack.c.l.b16 %v124
    %v757 = vunpack.c.h.b16 %v124
    %v758 = vunpack.c.l.b16 %v125
    %v759 = vunpack.c.h.b16 %v125
    %v760 = vunpack.c.l.b16 %v126
    %v761 = vunpack.c.h.b16 %v126
    %v762 = vunpack.c.l.b16 %v127
    %v763 = vunpack.c.h.b16 %v127
    %v764 = vunpack.c.l.b16 %v128
    %v765 = vunpack.c.h.b16 %v128
    %v766 = vunpack.c.l.b16 %v129
    %v767 = vunpack.c.h.b16 %v129
    %v768 = vunpack.c.l.b16 %v130
    %v769 = vunpack.c.h.b16 %v130
    %v770 = vunpack.c.l.b16 %v131
    %v771 = vunpack.c.h.b16 %v131
    %v772 = vunpack.c.l.b16 %v132
    %v773 = vunpack.c.h.b16 %v132
    %v774 = vunpack.c.l.b16 %v133
    %v775 = vunpack.c.h.b16 %v133
    %v776 = vunpack.c.l.b16 %v134
    %v777 = vunpack.c.h.b16 %v134
    %v778 = vunpack.c.l.b16 %v135
    %v779 = vunpack.c.h.b16 %v135
    %v780 = vunpack.c.l.b16 %v136
    %v781 = vunpack.c.h.b16 %v136
    %v782 = vunpack.c.l.b16 %v137
    %v783 = vunpack.c.h.b16 %v137
    %v784 = vunpack.c.l.b16 %v138
    %v785 = vunpack.c.h.b16 %v138
    %v786 = vunpack.c.l.b16 %v139
    %v787 = vunpack.c.h.b16 %v139
    %v788 = vunpack.c.l.b16 %v140
    %v789 = vunpack.c.h.b16 %v140
    %v790 = vunpack.c.l.b16 %v141
    %v791 = vunpack.c.h.b16 %v141
    %v792 = vunpack.c.l.b16 %v142
    %v793 = vunpack.c.h.b16 %v142
    %v794 = vunpack.c.l.b16 %v143
    %v795 = vunpack.c.h.b16 %v143
    %v796 = vunpack.c.l.b16 %v144
    %v797 = vunpack.c.h.b16 %v144
    %v798 = vunpack.c.l.b16 %v145
    %v799 = vunpack.c.h.b16 %v145
    %v800 = vunpack.c.l.b16 %v146
    %v801 = vunpack.c.h.b16 %v146
    %v802 = vunpack.c.l.b16 %v147
    %v803 = vunpack.c.h.b16 %v147
    %v804 = vunpack.c.l.b16 %v148
    %v805 = vunpack.c.h.b16 %v148
    %v806 = vunpack.c.l.b16 %v149
    %v807 = vunpack.c.h.b16 %v149
    %v808 = vunpack.c.l.b16 %v150
    %v809 = vunpack.c.h.b16 %v150
    %v810 = vunpack.c.l.b16 %v151
    %v811 = vunpack.c.h.b16 %v151
    %v812 = vunpack.c.l.b16 %v152
    %v813 = vunpack.c.h.b16 %v152
    %v814 = vunpack.c.l.b16 %v153
    %v815 = vunpack.c.h.b16 %v153
    %v816 = vunpack.c.l.b16 %v154
    %v817 = vunpack.c.h.b16 %v154
    %v818 = vunpack.c.l.b16 %v155
    %v819 = vunpack.c.h.b16 %v155
    %v820 = vunpack.c.l.b16 %v156
    %v821 = vunpack.c.h.b16 %v156
    %v822 = vunpack.c.l.b16 %v157
    %v823 = vunpack.c.h.b16 %v157
    %v824 = vunpack.c.l.b16 %v158
    %v825 = vunpack.c.h.b16 %v158
    %v826 = vunpack.c.l.b16 %v159
    %v827 = vunpack.c.h.b16 %v159
    %v828 = vunpack.c.l.b16 %v160
    %v829 = vunpack.c.h.b16 %v160
    %v830 = vunpack.c.l.b16 %v161
    %v831 = vunpack.c.h.b16 %v161
    %v832 = vunpack.c.l.b16 %v162
    %v833 = vunpack.c.h.b16 %v162
    %v834 = vunpack.c.l.b16 %v163
    %v835 = vunpack.c.h.b16 %v163
    %v836 = vunpack.c.l.b16 %v164
    %v837 = vunpack.c.h.b16 %v164
    %v838 = vunpack.c.l.b16 %v165
    %v839 = vunpack.c.h.b16 %v165
    %v840 = vunpack.c.l.b16 %v166
    %v841 = vunpack.c.h.b16 %v166
    %v842 = vunpack.c.l.b16 %v167
    %v843 = vunpack.c.h.b16 %v167
    %v844 = vunpack.c.l.b16 %v168
    %v845 = vunpack.c.h.b16 %v168
    %v846 = vunpack.c.l.b16 %v169
    %v847 = vunpack.c.h.b16 %v169
    %v848 = vunpack.c.l.b16 %v170
    %v849 = vunpack.c.h.b16 %v170
    %v850 = vunpack.c.l.b16 %v171
    %v851 = vunpack.c.h.b16 %v171
    %v852 = vunpack.c.l.b16 %v172
    %v853 = vunpack.c.h.b16 %v172
    %v854 = vunpack.c.l.b16 %v173
    %v855 = vunpack.c.h.b16 %v173
    %v856 = vunpack.c.l.b16 %v174
    %v857 = vunpack.c.h.b16 %v174
    %v858 = vunpack.c.l.b16 %v175
    %v859 = vunpack.c.h.b16 %v175
    %v860 = vunpack.c.l.b16 %v176
    %v861 = vunpack.c.h.b16 %v176
    %v862 = vunpack.c.l.b16 %v177
    %v863 = vunpack.c.h.b16 %v177
    %v864 = vunpack.c.l.b16 %v178
    %v865 = vunpack.c.h.b16 %v178
    %v866 = vunpack.c.l.b16 %v179
    %v867 = vunpack.c.h.b16 %v179
    %v868 = vunpack.c.l.b16 %v180
    %v869 = vunpack.c.h.b16 %v180
    %v870 = vunpack.c.l.b16 %v181
    %v871 = vunpack.c.h.b16 %v181
    %v872 = vunpack.c.l.b16 %v182
    %v873 = vunpack.c.h.b16 %v182
    %v874 = vunpack.c.l.b16 %v183
    %v875 = vunpack.c.h.b16 %v183
    %v876 = vunpack.c.l.b16 %v184
    %v877 = vunpack.c.h.b16 %v184
    %v878 = vunpack.c.l.b16 %v185
    %v879 = vunpack.c.h.b16 %v185
    %v880 = vunpack.c.l.b16 %v186
    %v881 = vunpack.c.h.b16 %v186
    %v882 = vunpack.c.l.b16 %v187
    %v883 = vunpack.c.h.b16 %v187
    %v884 = vunpack.c.l.b16 %v188
    %v885 = vunpack.c.h.b16 %v188
    %v886 = vunpack.c.l.b16 %v189
    %v887 = vunpack.c.h.b16 %v189
    %v888 = vunpack.c.l.b16 %v190
    %v889 = vunpack.c.h.b16 %v190
    %v890 = vunpack.c.l.b16 %v191
    %v891 = vunpack.c.h.b16 %v191
    %v892 = vunpack.c.l.b16 %v192
    %v893 = vunpack.c.h.b16 %v192
    %v894 = vunpack.c.l.b16 %v193
    %v895 = vunpack.c.h.b16 %v193
    %v896 = vunpack.c.l.b16 %v194
    %v897 = vunpack.c.h.b16 %v194
    %v898 = vunpack.c.l.b16 %v195
    %v899 = vunpack.c.h.b16 %v195
    %v900 = vunpack.c.l.b16 %v196
    %v901 = vunpack.c.h.b16 %v196
    %v902 = vunpack.c.l.b16 %v197
    %v903 = vunpack.c.h.b16 %v197
    %v904 = vunpack.c.l.b16 %v198
    %v905 = vunpack.c.h.b16 %v198
    %v906 = vunpack.c.l.b16 %v199
    %v907 = vunpack.c.h.b16 %v199
    %v908 = vunpack.c.l.b16 %v200
    %v909 = vunpack.c.h.b16 %v200
    %v910 = vunpack.c.l.b16 %v201
    %v911 = vunpack.c.h.b16 %v201
    %v912 = vunpack.c.l.b16 %v202
    %v913 = vunpack.c.h.b16 %v202
    %v914 = vunpack.c.l.b16 %v203
    %v915 = vunpack.c.h.b16 %v203
    %v916 = vunpack.c.l.b16 %v204
    %v917 = vunpack.c.h.b16 %v204
    %v918 = vunpack.c.l.b16 %v205
    %v919 = vunpack.c.h.b16 %v205
    %v920 = vunpack.c.l.b16 %v206
    %v921 = vunpack.c.h.b16 %v206
    %v922 = vunpack.c.l.b16 %v207
    %v923 = vunpack.c.h.b16 %v207
    %v924 = vunpack.c.l.b16 %v208
    %v925 = vunpack.c.h.b16 %v208
    %v926 = vunpack.c.l.b16 %v209
    %v927 = vunpack.c.h.b16 %v209
    %v928 = vunpack.c.l.b16 %v210
    %v929 = vunpack.c.h.b16 %v210
    %v930 = vunpack.c.l.b16 %v211
    %v931 = vunpack.c.h.b16 %v211
    %v932 = vunpack.c.l.b16 %v212
    %v933 = vunpack.c.h.b16 %v212
    %v934 = vunpack.c.l.b16 %v213
    %v935 = vunpack.c.h.b16 %v213
    %v936 = vunpack.c.l.b16 %v214
    %v937 = vunpack.c.h.b16 %v214
    %v938 = vunpack.c.l.b16 %v215
    %v939 = vunpack.c.h.b16 %v215
    %v940 = vunpack.c.l.b16 %v216
    %v941 = vunpack.c.h.b16 %v216
    %v942 = vunpack.c.l.b16 %v217
    %v943 = vunpack.c.h.b16 %v217
    %v944 = vunpack.c.l.b16 %v218
    %v945 = vunpack.c.h.b16 %v218
    %v946 = vunpack.c.l.b16 %v219
    %v947 = vunpack.c.h.b16 %v219
    %v948 = vunpack.c.l.b16 %v220
    %v949 = vunpack.c.h.b16 %v220
    %v950 = vunpack.c.l.b16 %v221
    %v951 = vunpack.c.h.b16 %v221
    %v952 = vunpack.c.l.b16 %v222
    %v953 = vunpack.c.h.b16 %v222
    %v954 = vunpack.c.l.b16 %v223
    %v955 = vunpack.c.h.b16 %v223
    %v956 = vunpack.c.l.b16 %v224
    %v957 = vunpack.c.h.b16 %v224
    %v958 = vunpack.c.l.b16 %v225
    %v959 = vunpack.c.h.b16 %v225
    %v960 = vunpack.c.l.b16 %v226
    %v961 = vunpack.c.h.b16 %v226
    %v962 = vunpack.c.l.b16 %v227
    %v963 = vunpack.c.h.b16 %v227
    %v964 = vunpack.c.l.b16 %v228
    %v965 = vunpack.c.h.b16 %v228
    %v966 = vunpack.c.l.b16 %v229
    %v967 = vunpack.c.h.b16 %v229
    %v968 = vunpack.c.l.b16 %v230
    %v969 = vunpack.c.h.b16 %v230
    %v970 = vunpack.c.l.b16 %v231
    %v971 = vunpack.c.h.b16 %v231
    %v972 = vunpack.c.l.b16 %v232
    %v973 = vunpack.c.h.b16 %v232
    %v974 = vunpack.c.l.b16 %v233
    %v975 = vunpack.c.h.b16 %v233
    %v976 = vunpack.c.l.b16 %v234
    %v977 = vunpack.c.h.b16 %v234
    %v978 = vunpack.c.l.b16 %v235
    %v979 = vunpack.c.h.b16 %v235
    %v980 = vunpack.c.l.b16 %v236
    %v981 = vunpack.c.h.b16 %v236
    %v982 = vunpack.c.l.b16 %v237
    %v983 = vunpack.c.h.b16 %v237
    %v984 = vunpack.c.l.b16 %v238
    %v985 = vunpack.c.h.b16 %v238
    %v986 = vunpack.c.l.b16 %v239
    %v987 = vunpack.c.h.b16 %v239
    %v988 = vunpack.c.l.b16 %v240
    %v989 = vunpack.c.h.b16 %v240
    %v990 = vunpack.c.l.b16 %v241
    %v991 = vunpack.c.h.b16 %v241
    %v992 = vunpack.c.l.b16 %v242
    %v993 = vunpack.c.h.b16 %v242
    %v994 = vunpack.c.l.b16 %v243
    %v995 = vunpack.c.h.b16 %v243
    %v996 = vunpack.c.l.b16 %v244
    %v997 = vunpack.c.h.b16 %v244
    %v998 = vunpack.c.l.b16 %v245
    %v999 = vunpack.c.h.b16 %v245
    %v1000 = vunpack.c.l.b16 %v246
    %v1001 = vunpack.c.h.b16 %v246
    %v1002 = vunpack.c.l.b16 %v247
    %v1003 = vunpack.c.h.b16 %v247
    %v1004 = vunpack.c.l.b16 %v248
    %v1005 = vunpack.c.h.b16 %v248
    %v1006 = vunpack.c.l.b16 %v249
    %v1007 = vunpack.c.h.b16 %v249
    %v1008 = vunpack.c.l.b16 %v250
    %v1009 = vunpack.c.h.b16 %v250
    %v1010 = vunpack.c.l.b16 %v251
    %v1011 = vunpack.c.h.b16 %v251
    %v1012 = vunpack.c.l.b16 %v252
    %v1013 = vunpack.c.h.b16 %v252
    %v1014 = vunpack.c.l.b16 %v253
    %v1015 = vunpack.c.h.b16 %v253
    %v1016 = vunpack.c.l.b16 %v254
    %v1017 = vunpack.c.h.b16 %v254
    %v1018 = vunpack.c.l.b16 %v255
    %v1019 = vunpack.c.h.b16 %v255
    %v1020 = vunpack.c.l.b16 %v256
    %v1021 = vunpack.c.h.b16 %v256
    %v1022 = vunpack.c.l.b16 %v257
    %v1023 = vunpack.c.h.b16 %v257
    %v1024 = vunpack.c.l.b16 %v258
    %v1025 = vunpack.c.h.b16 %v258
    %v1026 = vunpack.c.l.b16 %v259
    %v1027 = vunpack.c.h.b16 %v259
    %v1028 = vunpack.c.l.b16 %v260
    %v1029 = vunpack.c.h.b16 %v260
    %v1030 = vunpack.c.l.b16 %v261
    %v1031 = vunpack.c.h.b16 %v261
    %v1032 = vunpack.c.l.b16 %v262
    %v1033 = vunpack.c.h.b16 %v262
    %v1034 = vunpack.c.l.b16 %v263
    %v1035 = vunpack.c.h.b16 %v263
    %v1036 = vunpack.c.l.b16 %v264
    %v1037 = vunpack.c.h.b16 %v264
    %v1038 = vunpack.c.l.b16 %v265
    %v1039 = vunpack.c.h.b16 %v265
    %v1040 = vunpack.c.l.b16 %v266
    %v1041 = vunpack.c.h.b16 %v266
    %v1042 = vunpack.c.l.b16 %v267
    %v1043 = vunpack.c.h.b16 %v267
    %v1044 = vunpack.c.l.b16 %v268
    %v1045 = vunpack.c.h.b16 %v268
    %v1046 = vunpack.c.l.b16 %v269
    %v1047 = vunpack.c.h.b16 %v269
    %v1048 = vunpack.c.l.b16 %v270
    %v1049 = vunpack.c.h.b16 %v270
    %v1050 = vunpack.c.l.b16 %v271
    %v1051 = vunpack.c.h.b16 %v271
    %v1052 = vunpack.c.l.b16 %v272
    %v1053 = vunpack.c.h.b16 %v272
    %v1054 = vunpack.c.l.b16 %v273
    %v1055 = vunpack.c.h.b16 %v273
    %v1056 = vunpack.c.l.b16 %v274
    %v1057 = vunpack.c.h.b16 %v274
    %v1058 = vunpack.c.l.b16 %v275
    %v1059 = vunpack.c.h.b16 %v275
    %v1060 = vunpack.c.l.b16 %v276
    %v1061 = vunpack.c.h.b16 %v276
    %v1062 = vunpack.c.l.b16 %v277
    %v1063 = vunpack.c.h.b16 %v277
    %v1064 = vunpack.c.l.b16 %v278
    %v1065 = vunpack.c.h.b16 %v278
    %v1066 = vunpack.c.l.b16 %v279
    %v1067 = vunpack.c.h.b16 %v279
    %v1068 = vunpack.c.l.b16 %v280
    %v1069 = vunpack.c.h.b16 %v280
    %v1070 = vunpack.c.l.b16 %v281
    %v1071 = vunpack.c.h.b16 %v281
    %v1072 = vunpack.c.l.b16 %v282
    %v1073 = vunpack.c.h.b16 %v282
    %v1074 = vunpack.c.l.b16 %v283
    %v1075 = vunpack.c.h.b16 %v283
    %v1076 = vunpack.c.l.b16 %v284
    %v1077 = vunpack.c.h.b16 %v284
    %v1078 = vunpack.c.l.b16 %v285
    %v1079 = vunpack.c.h.b16 %v285
    %v1080 = vunpack.c.l.b16 %v286
    %v1081 = vunpack.c.h.b16 %v286
    %v1082 = vunpack.c.l.b16 %v287
    %v1083 = vunpack.c.h.b16 %v287
    %v1084 = vunpack.c.l.b16 %v288
    %v1085 = vunpack.c.h.b16 %v288
    %v1086 = vunpack.c.l.b16 %v289
    %v1087 = vunpack.c.h.b16 %v289
    %v1088 = vunpack.c.l.b16 %v290
    %v1089 = vunpack.c.h.b16 %v290
    %v1090 = vunpack.c.l.b16 %v291
    %v1091 = vunpack.c.h.b16 %v291
    %v1092 = vunpack.c.l.b16 %v292
    %v1093 = vunpack.c.h.b16 %v292
    %v1094 = vunpack.c.l.b16 %v293
    %v1095 = vunpack.c.h.b16 %v293
    %v1096 = vunpack.c.l.b16 %v294
    %v1097 = vunpack.c.h.b16 %v294
    %v1098 = vunpack.c.l.b16 %v295
    %v1099 = vunpack.c.h.b16 %v295
    %v1100 = vunpack.c.l.b16 %v296
    %v1101 = vunpack.c.h.b16 %v296
    %v1102 = vunpack.c.l.b16 %v297
    %v1103 = vunpack.c.h.b16 %v297
    %v1104 = vunpack.c.l.b16 %v298
    %v1105 = vunpack.c.h.b16 %v298
    %v1106 = vunpack.c.l.b16 %v299
    %v1107 = vunpack.c.h.b16 %v299
    %v1108 = vunpack.c.l.b16 %v300
    %v1109 = vunpack.c.h.b16 %v300
    %v1110 = vunpack.c.l.b16 %v301
    %v1111 = vunpack.c.h.b16 %v301
    %v1112 = vunpack.c.l.b16 %v302
    %v1113 = vunpack.c.h.b16 %v302
    %v1114 = vunpack.c.l.b16 %v303
    %v1115 = vunpack.c.h.b16 %v303
    %v1116 = vunpack.c.l.b16 %v304
    %v1117 = vunpack.c.h.b16 %v304
    %v1118 = vunpack.c.l.b16 %v305
    %v1119 = vunpack.c.h.b16 %v305
    %v1120 = vunpack.c.l.b16 %v306
    %v1121 = vunpack.c.h.b16 %v306
    %v1122 = vunpack.c.l.b16 %v307
    %v1123 = vunpack.c.h.b16 %v307
    %v1124 = vunpack.c.l.b16 %v308
    %v1125 = vunpack.c.h.b16 %v308
    %v1126 = vunpack.c.l.b16 %v309
    %v1127 = vunpack.c.h.b16 %v309
    %v1128 = vpack.c.b16 %v620, %v616
    %v1129 = vpack.c.b16 %v621, %v617
    %v1130 = vpack.c.b16 %v622, %v618
    %v1131 = vpack.c.b16 %v623, %v619
    %v1132 = vpack.c.b16 %v628, %v624
    %v1133 = vpack.c.b16 %v629, %v625
    %v1134 = vpack.c.b16 %v630, %v626
    %v1135 = vpack.c.b16 %v631, %v627
    %v1136 = vpack.c.b16 %v636, %v632
    %v1137 = vpack.c.b16 %v637, %v633
    %v1138 = vpack.c.b16 %v638, %v634
    %v1139 = vpack.c.b16 %v639, %v635
    %v1140 = vpack.c.b16 %v644, %v640
    %v1141 = vpack.c.b16 %v645, %v641
    %v1142 = vpack.c.b16 %v646, %v642
    %v1143 = vpack.c.b16 %v647, %v643
    %v1144 = vpack.c.b16 %v652, %v648
    %v1145 = vpack.c.b16 %v653, %v649
    %v1146 = vpack.c.b16 %v654, %v650
    %v1147 = vpack.c.b16 %v655, %v651
    %v1148 = vpack.c.b16 %v660, %v656
    %v1149 = vpack.c.b16 %v661, %v657
    %v1150 = vpack.c.b16 %v662, %v658
    %v1151 = vpack.c.b16 %v663, %v659
    %v1152 = vpack.c.b16 %v668, %v664
    %v1153 = vpack.c.b16 %v669, %v665
    %v1154 = vpack.c.b16 %v670, %v666
    %v1155 = vpack.c.b16 %v671, %v667
    %v1156 = vpack.c.b16 %v676, %v672
    %v1157 = vpack.c.b16 %v677, %v673
    %v1158 = vpack.c.b16 %v678, %v674
    %v1159 = vpack.c.b16 %v679, %v675
    %v1160 = vpack.c.b16 %v684, %v680
    %v1161 = vpack.c.b16 %v685, %v681
    %v1162 = vpack.c.b16 %v686, %v682
    %v1163 = vpack.c.b16 %v687, %v683
    %v1164 = vpack.c.b16 %v692, %v688
    %v1165 = vpack.c.b16 %v693, %v689
    %v1166 = vpack.c.b16 %v694, %v690
    %v1167 = vpack.c.b16 %v695, %v691
    %v1168 = vpack.c.b16 %v700, %v696
    %v1169 = vpack.c.b16 %v701, %v697
    %v1170 = vpack.c.b16 %v702, %v698
    %v1171 = vpack.c.b16 %v703, %v699
    %v1172 = vpack.c.b16 %v708, %v704
    %v1173 = vpack.c.b16 %v709, %v705
    %v1174 = vpack.c.b16 %v710, %v706
    %v1175 = vpack.c.b16 %v711, %v707
    %v1176 = vpack.c.b16 %v716, %v712
    %v1177 = vpack.c.b16 %v717, %v713
    %v1178 = vpack.c.b16 %v718, %v714
    %v1179 = vpack.c.b16 %v719, %v715
    %v1180 = vpack.c.b16 %v724, %v720
    %v1181 = vpack.c.b16 %v725, %v721
    %v1182 = vpack.c.b16 %v726, %v722
    %v1183 = vpack.c.b16 %v727, %v723
    %v1184 = vpack.c.b16 %v732, %v728
    %v1185 = vpack.c.b16 %v733, %v729
    %v1186 = vpack.c.b16 %v734, %v730
    %v1187 = vpack.c.b16 %v735, %v731
    %v1188 = vpack.c.b16 %v740, %v736
    %v1189 = vpack.c.b16 %v741, %v737
    %v1190 = vpack.c.b16 %v742, %v738
    %v1191 = vpack.c.b16 %v743, %v739
    %v1192 = vpack.c.b16 %v748, %v744
    %v1193 = vpack.c.b16 %v749, %v745
    %v1194 = vpack.c.b16 %v750, %v746
    %v1195 = vpack.c.b16 %v751, %v747
    %v1196 = vpack.c.b16 %v756, %v752
    %v1197 = vpack.c.b16 %v757, %v753
    %v1198 = vpack.c.b16 %v758, %v754
    %v1199 = vpack.c.b16 %v759, %v755
    %v1200 = vpack.c.b16 %v764, %v760
    %v1201 = vpack.c.b16 %v765, %v761
    %v1202 = vpack.c.b16 %v766, %v762
    %v1203 = vpack.c.b16 %v767, %v763
    %v1204 = vpack.c.b16 %v772, %v768
    %v1205 = vpack.c.b16 %v773, %v769
    %v1206 = vpack.c.b16 %v774, %v770
    %v1207 = vpack.c.b16 %v775, %v771
    %v1208 = vpack.c.b16 %v780, %v776
    %v1209 = vpack.c.b16 %v781, %v777
    %v1210 = vpack.c.b16 %v782, %v778
    %v1211 = vpack.c.b16 %v783, %v779
    %v1212 = vpack.c.b16 %v788, %v784
    %v1213 = vpack.c.b16 %v789, %v785
    %v1214 = vpack.c.b16 %v790, %v786
    %v1215 = vpack.c.b16 %v791, %v787
    %v1216 = vpack.c.b16 %v796, %v792
    %v1217 = vpack.c.b16 %v797, %v793
    %v1218 = vpack.c.b16 %v798, %v794
    %v1219 = vpack.c.b16 %v799, %v795
    %v1220 = vpack.c.b16 %v804, %v800
    %v1221 = vpack.c.b16 %v805, %v801
    %v1222 = vpack.c.b16 %v806, %v802
    %v1223 = vpack.c.b16 %v807, %v803
    %v1224 = vpack.c.b16 %v812, %v808
    %v1225 = vpack.c.b16 %v813, %v809
    %v1226 = vpack.c.b16 %v814, %v810
    %v1227 = vpack.c.b16 %v815, %v811
    %v1228 = vpack.c.b16 %v820, %v816
    %v1229 = vpack.c.b16 %v821, %v817
    %v1230 = vpack.c.b16 %v822, %v818
    %v1231 = vpack.c.b16 %v823, %v819
    %v1232 = vpack.c.b16 %v828, %v824
    %v1233 = vpack.c.b16 %v829, %v825
    %v1234 = vpack.c.b16 %v830, %v826
    %v1235 = vpack.c.b16 %v831, %v827
    %v1236 = vpack.c.b16 %v836, %v832
    %v1237 = vpack.c.b16 %v837, %v833
    %v1238 = vpack.c.b16 %v838, %v834
    %v1239 = vpack.c.b16 %v839, %v835
    %v1240 = vpack.c.b16 %v844, %v840
    %v1241 = vpack.c.b16 %v845, %v841
    %v1242 = vpack.c.b16 %v846, %v842
    %v1243 = vpack.c.b16 %v847, %v843
    %v1244 = vpack.c.b16 %v852, %v848
    %v1245 = vpack.c.b16 %v853, %v849
    %v1246 = vpack.c.b16 %v854, %v850
    %v1247 = vpack.c.b16 %v855, %v851
    %v1248 = vpack.c.b16 %v860, %v856
    %v1249 = vpack.c.b16 %v861, %v857
    %v1250 = vpack.c.b16 %v862, %v858
    %v1251 = vpack.c.b16 %v863, %v859
    %v1252 = vpack.c.b16 %v868, %v864
    %v1253 = vpack.c.b16 %v869, %v865
    %v1254 = vpack.c.b16 %v870, %v866
    %v1255 = vpack.c.b16 %v871, %v867
    %v1256 = vpack.c.b16 %v876, %v872
    %v1257 = vpack.c.b16 %v877, %v873
    %v1258 = vpack.c.b16 %v878, %v874
    %v1259 = vpack.c.b16 %v879, %v875
    %v1260 = vpack.c.b16 %v884, %v880
    %v1261 = vpack.c.b16 %v885, %v881
    %v1262 = vpack.c.b16 %v886, %v882
    %v1263 = vpack.c.b16 %v887, %v883
    %v1264 = vpack.c.b16 %v892, %v888
    %v1265 = vpack.c.b16 %v893, %v889
    %v1266 = vpack.c.b16 %v894, %v890
    %v1267 = vpack.c.b16 %v895, %v891
    %v1268 = vpack.c.b16 %v900, %v896
    %v1269 = vpack.c.b16 %v901, %v897
    %v1270 = vpack.c.b16 %v902, %v898
    %v1271 = vpack.c.b16 %v903, %v899
    %v1272 = vpack.c.b16 %v908, %v904
    %v1273 = vpack.c.b16 %v909, %v905
    %v1274 = vpack.c.b16 %v910, %v906
    %v1275 = vpack.c.b16 %v911, %v907
    %v1276 = vpack.c.b16 %v916, %v912
    %v1277 = vpack.c.b16 %v917, %v913
    %v1278 = vpack.c.b16 %v918, %v914
    %v1279 = vpack.c.b16 %v919, %v915
    %v1280 = vpack.c.b16 %v924, %v920
    %v1281 = vpack.c.b16 %v925, %v921
    %v1282 = vpack.c.b16 %v926, %v922
    %v1283 = vpack.c.b16 %v927, %v923
    %v1284 = vpack.c.b16 %v932, %v928
    %v1285 = vpack.c.b16 %v933, %v929
    %v1286 = vpack.c.b16 %v934, %v930
    %v1287 = vpack.c.b16 %v935, %v931
    %v1288 = vpack.c.b16 %v940, %v936
    %v1289 = vpack.c.b16 %v941, %v937
    %v1290 = vpack.c.b16 %v942, %v938
    %v1291 = vpack.c.b16 %v943, %v939
    %v1292 = vpack.c.b16 %v948, %v944
    %v1293 = vpack.c.b16 %v949, %v945
    %v1294 = vpack.c.b16 %v950, %v946
    %v1295 = vpack.c.b16 %v951, %v947
    %v1296 = vpack.c.b16 %v956, %v952
    %v1297 = vpack.c.b16 %v957, %v953
    %v1298 = vpack.c.b16 %v958, %v954
    %v1299 = vpack.c.b16 %v959, %v955
    %v1300 = vpack.c.b16 %v964, %v960
    %v1301 = vpack.c.b16 %v965, %v961
    %v1302 = vpack.c.b16 %v966, %v962
    %v1303 = vpack.c.b16 %v967, %v963
    %v1304 = vpack.c.b16 %v972, %v968
    %v1305 = vpack.c.b16 %v973, %v969
    %v1306 = vpack.c.b16 %v974, %v970
    %v1307 = vpack.c.b16 %v975, %v971
    %v1308 = vpack.c.b16 %v980, %v976
    %v1309 = vpack.c.b16 %v981, %v977
    %v1310 = vpack.c.b16 %v982, %v978
    %v1311 = vpack.c.b16 %v983, %v979
    %v1312 = vpack.c.b16 %v988, %v984
    %v1313 = vpack.c.b16 %v989, %v985
    %v1314 = vpack.c.b16 %v990, %v986
    %v1315 = vpack.c.b16 %v991, %v987
    %v1316 = vpack.c.b16 %v996, %v992
    %v1317 = vpack.c.b16 %v997, %v993
    %v1318 = vpack.c.b16 %v998, %v994
    %v1319 = vpack.c.b16 %v999, %v995
    %v1320 = vpack.c.b16 %v1004, %v1000
    %v1321 = vpack.c.b16 %v1005, %v1001
    %v1322 = vpack.c.b16 %v1006, %v1002
    %v1323 = vpack.c.b16 %v1007, %v1003
    %v1324 = vpack.c.b16 %v1012, %v1008
    %v1325 = vpack.c.b16 %v1013, %v1009
    %v1326 = vpack.c.b16 %v1014, %v1010
    %v1327 = vpack.c.b16 %v1015, %v1011
    %v1328 = vpack.c.b16 %v1020, %v1016
    %v1329 = vpack.c.b16 %v1021, %v1017
    %v1330 = vpack.c.b16 %v1022, %v1018
    %v1331 = vpack.c.b16 %v1023, %v1019
    %v1332 = vpack.c.b16 %v1028, %v1024
    %v1333 = vpack.c.b16 %v1029, %v1025
    %v1334 = vpack.c.b16 %v1030, %v1026
    %v1335 = vpack.c.b16 %v1031, %v1027
    %v1336 = vpack.c.b16 %v1036, %v1032
    %v1337 = vpack.c.b16 %v1037, %v1033
    %v1338 = vpack.c.b16 %v1038, %v1034
    %v1339 = vpack.c.b16 %v1039, %v1035
    %v1340 = vpack.c.b16 %v1044, %v1040
    %v1341 = vpack.c.b16 %v1045, %v1041
    %v1342 = vpack.c.b16 %v1046, %v1042
    %v1343 = vpack.c.b16 %v1047, %v1043
    %v1344 = vpack.c.b16 %v1052, %v1048
    %v1345 = vpack.c.b16 %v1053, %v1049
    %v1346 = vpack.c.b16 %v1054, %v1050
    %v1347 = vpack.c.b16 %v1055, %v1051
    %v1348 = vpack.c.b16 %v1060, %v1056
    %v1349 = vpack.c.b16 %v1061, %v1057
    %v1350 = vpack.c.b16 %v1062, %v1058
    %v1351 = vpack.c.b16 %v1063, %v1059
    %v1352 = vpack.c.b16 %v1068, %v1064
    %v1353 = vpack.c.b16 %v1069, %v1065
    %v1354 = vpack.c.b16 %v1070, %v1066
    %v1355 = vpack.c.b16 %v1071, %v1067
    %v1356 = vpack.c.b16 %v1076, %v1072
    %v1357 = vpack.c.b16 %v1077, %v1073
    %v1358 = vpack.c.b16 %v1078, %v1074
    %v1359 = vpack.c.b16 %v1079, %v1075
    %v1360 = vpack.c.b16 %v1084, %v1080
    %v1361 = vpack.c.b16 %v1085, %v1081
    %v1362 = vpack.c.b16 %v1086, %v1082
    %v1363 = vpack.c.b16 %v1087, %v1083
    %v1364 = vpack.c.b16 %v1092, %v1088
    %v1365 = vpack.c.b16 %v1093, %v1089
    %v1366 = vpack.c.b16 %v1094, %v1090
    %v1367 = vpack.c.b16 %v1095, %v1091
    %v1368 = vpack.c.b16 %v1100, %v1096
    %v1369 = vpack.c.b16 %v1101, %v1097
    %v1370 = vpack.c.b16 %v1102, %v1098
    %v1371 = vpack.c.b16 %v1103, %v1099
    %v1372 = vpack.c.b16 %v1108, %v1104
    %v1373 = vpack.c.b16 %v1109, %v1105
    %v1374 = vpack.c.b16 %v1110, %v1106
    %v1375 = vpack.c.b16 %v1111, %v1107
    %v1376 = vpack.c.b16 %v1116, %v1112
    %v1377 = vpack.c.b16 %v1117, %v1113
    %v1378 = vpack.c.b16 %v1118, %v1114
    %v1379 = vpack.c.b16 %v1119, %v1115
    %v1380 = vpack.c.b16 %v1124, %v1120
    %v1381 = vpack.c.b16 %v1125, %v1121
    %v1382 = vpack.c.b16 %v1126, %v1122
    %v1383 = vpack.c.b16 %v1127, %v1123
    %1640 = vmatprep.subr.bf16.mxu0 %v1157
    %1641 = vmatpush1.bf16.msra.mxu0 %v1156
    %1642 = vmatprep.subr.bf16.mxu0 %v1153
    %1643 = vmatpush1.bf16.msra.mxu0 %v1152
    %1644 = vmatprep.subr.bf16.mxu0 %v1149
    %1645 = vmatpush1.bf16.msra.mxu0 %v1148
    %1646 = vmatprep.subr.bf16.mxu0 %v1145
    %1647 = vmatpush1.bf16.msra.mxu0 %v1144
    %1648 = vmatprep.subr.bf16.mxu0 %v1141
    %1649 = vmatpush1.bf16.msra.mxu0 %v1140
    %1650 = vmatprep.subr.bf16.mxu0 %v1137
    %1651 = vmatpush1.bf16.msra.mxu0 %v1136
    %1652 = vmatprep.subr.bf16.mxu0 %v1133
    %1653 = vmatpush1.bf16.msra.mxu0 %v1132
    %1654 = vmatprep.subr.bf16.mxu0 %v1129
    %1655 = vmatpush1.bf16.msra.mxu0 %v1128
    %1656 = vmatprep.subr.bf16.mxu0 %v1189
    %1657 = vmatpush2.bf16.msra.mxu0 %v1188
    %1658 = vmatprep.subr.bf16.mxu0 %v1185
    %1659 = vmatpush2.bf16.msra.mxu0 %v1184
    %1660 = vmatprep.subr.bf16.mxu0 %v1181
    %1661 = vmatpush2.bf16.msra.mxu0 %v1180
    %1662 = vmatprep.subr.bf16.mxu0 %v1177
    %1663 = vmatpush2.bf16.msra.mxu0 %v1176
    %1664 = vmatprep.subr.bf16.mxu0 %v1173
    %1665 = vmatpush2.bf16.msra.mxu0 %v1172
    %1666 = vmatprep.subr.bf16.mxu0 %v1169
    %1667 = vmatpush2.bf16.msra.mxu0 %v1168
    %1668 = vmatprep.subr.bf16.mxu0 %v1165
    %1669 = vmatpush2.bf16.msra.mxu0 %v1164
    %1670 = vmatprep.subr.bf16.mxu0 %v1161
    %1671 = vmatpush2.bf16.msra.mxu0 %v1160
    %1672 = vmatprep.mubr.bf16.mxu0 %v345
    %1673 = vmatmul.mubr.bf16.gmra.mxu0 %v344
    %v1674 = vpop.f32.mrf.mxu0
    %v1675 = vadd.f32 %v315, %v1674
    %v1676 = vpop.f32.mrf.mxu0
    %v1677 = vadd.f32 %v319, %v1676
    %v1678 = vpop.f32.mrf.mxu0
    %v1679 = vpop.f32.mrf.mxu0
    %1680 = vdwg.mxu0
    %1681 = vmatprep.subr.bf16.mxu0 %v1221
    %1682 = vmatpush1.bf16.msra.mxu0 %v1220
    %1683 = vmatprep.subr.bf16.mxu0 %v1217
    %1684 = vmatpush1.bf16.msra.mxu0 %v1216
    %1685 = vmatprep.subr.bf16.mxu0 %v1213
    %1686 = vmatpush1.bf16.msra.mxu0 %v1212
    %1687 = vmatprep.subr.bf16.mxu0 %v1209
    %1688 = vmatpush1.bf16.msra.mxu0 %v1208
    %1689 = vmatprep.subr.bf16.mxu0 %v1205
    %1690 = vmatpush1.bf16.msra.mxu0 %v1204
    %1691 = vmatprep.subr.bf16.mxu0 %v1201
    %1692 = vmatpush1.bf16.msra.mxu0 %v1200
    %1693 = vmatprep.subr.bf16.mxu0 %v1197
    %1694 = vmatpush1.bf16.msra.mxu0 %v1196
    %1695 = vmatprep.subr.bf16.mxu0 %v1193
    %1696 = vmatpush1.bf16.msra.mxu0 %v1192
    %1697 = vmatprep.subr.bf16.mxu0 %v1253
    %1698 = vmatpush2.bf16.msra.mxu0 %v1252
    %1699 = vmatprep.subr.bf16.mxu0 %v1249
    %1700 = vmatpush2.bf16.msra.mxu0 %v1248
    %1701 = vmatprep.subr.bf16.mxu0 %v1245
    %1702 = vmatpush2.bf16.msra.mxu0 %v1244
    %1703 = vmatprep.subr.bf16.mxu0 %v1241
    %1704 = vmatpush2.bf16.msra.mxu0 %v1240
    %1705 = vmatprep.subr.bf16.mxu0 %v1237
    %1706 = vmatpush2.bf16.msra.mxu0 %v1236
    %1707 = vmatprep.subr.bf16.mxu0 %v1233
    %1708 = vmatpush2.bf16.msra.mxu0 %v1232
    %1709 = vmatprep.subr.bf16.mxu0 %v1229
    %1710 = vmatpush2.bf16.msra.mxu0 %v1228
    %1711 = vmatprep.subr.bf16.mxu0 %v1225
    %1712 = vmatpush2.bf16.msra.mxu0 %v1224
    %1713 = vmatprep.mubr.bf16.mxu0 %v347
    %1714 = vmatmul.mubr.bf16.gmra.mxu0 %v346
    %v1715 = vpop.f32.mrf.mxu0
    %v1716 = vadd.f32 %v1675, %v1715
    %v1717 = vpop.f32.mrf.mxu0
    %v1718 = vadd.f32 %v1677, %v1717
    %v1719 = vpop.f32.mrf.mxu0
    %v1720 = vpop.f32.mrf.mxu0
    %1721 = vdwg.mxu0
    %1722 = vmatprep.subr.bf16.mxu0 %v1285
    %1723 = vmatpush1.bf16.msra.mxu0 %v1284
    %1724 = vmatprep.subr.bf16.mxu0 %v1281
    %1725 = vmatpush1.bf16.msra.mxu0 %v1280
    %1726 = vmatprep.subr.bf16.mxu0 %v1277
    %1727 = vmatpush1.bf16.msra.mxu0 %v1276
    %1728 = vmatprep.subr.bf16.mxu0 %v1273
    %1729 = vmatpush1.bf16.msra.mxu0 %v1272
    %1730 = vmatprep.subr.bf16.mxu0 %v1269
    %1731 = vmatpush1.bf16.msra.mxu0 %v1268
    %1732 = vmatprep.subr.bf16.mxu0 %v1265
    %1733 = vmatpush1.bf16.msra.mxu0 %v1264
    %1734 = vmatprep.subr.bf16.mxu0 %v1261
    %1735 = vmatpush1.bf16.msra.mxu0 %v1260
    %1736 = vmatprep.subr.bf16.mxu0 %v1257
    %1737 = vmatpush1.bf16.msra.mxu0 %v1256
    %1738 = vmatprep.subr.bf16.mxu0 %v1317
    %1739 = vmatpush2.bf16.msra.mxu0 %v1316
    %1740 = vmatprep.subr.bf16.mxu0 %v1313
    %1741 = vmatpush2.bf16.msra.mxu0 %v1312
    %1742 = vmatprep.subr.bf16.mxu0 %v1309
    %1743 = vmatpush2.bf16.msra.mxu0 %v1308
    %1744 = vmatprep.subr.bf16.mxu0 %v1305
    %1745 = vmatpush2.bf16.msra.mxu0 %v1304
    %1746 = vmatprep.subr.bf16.mxu0 %v1301
    %1747 = vmatpush2.bf16.msra.mxu0 %v1300
    %1748 = vmatprep.subr.bf16.mxu0 %v1297
    %1749 = vmatpush2.bf16.msra.mxu0 %v1296
    %1750 = vmatprep.subr.bf16.mxu0 %v1293
    %1751 = vmatpush2.bf16.msra.mxu0 %v1292
    %1752 = vmatprep.subr.bf16.mxu0 %v1289
    %1753 = vmatpush2.bf16.msra.mxu0 %v1288
    %1754 = vmatprep.mubr.bf16.mxu0 %v349
    %1755 = vmatmul.mubr.bf16.gmra.mxu0 %v348
    %v1756 = vpop.f32.mrf.mxu0
    %v1757 = vadd.f32 %v1716, %v1756
    %v1758 = vpop.f32.mrf.mxu0
    %v1759 = vadd.f32 %v1718, %v1758
    %v1760 = vpop.f32.mrf.mxu0
    %v1761 = vpop.f32.mrf.mxu0
    %1762 = vdwg.mxu0
    %1763 = vmatprep.subr.bf16.mxu0 %v1349
    %1764 = vmatpush1.bf16.msra.mxu0 %v1348
    %1765 = vmatprep.subr.bf16.mxu0 %v1345
    %1766 = vmatpush1.bf16.msra.mxu0 %v1344
    %1767 = vmatprep.subr.bf16.mxu0 %v1341
    %1768 = vmatpush1.bf16.msra.mxu0 %v1340
    %1769 = vmatprep.subr.bf16.mxu0 %v1337
    %1770 = vmatpush1.bf16.msra.mxu0 %v1336
    %1771 = vmatprep.subr.bf16.mxu0 %v1333
    %1772 = vmatpush1.bf16.msra.mxu0 %v1332
    %1773 = vmatprep.subr.bf16.mxu0 %v1329
    %1774 = vmatpush1.bf16.msra.mxu0 %v1328
    %1775 = vmatprep.subr.bf16.mxu0 %v1325
    %1776 = vmatpush1.bf16.msra.mxu0 %v1324
    %1777 = vmatprep.subr.bf16.mxu0 %v1321
    %1778 = vmatpush1.bf16.msra.mxu0 %v1320
    %1779 = vmatprep.subr.bf16.mxu0 %v1381
    %1780 = vmatpush2.bf16.msra.mxu0 %v1380
    %1781 = vmatprep.subr.bf16.mxu0 %v1377
    %1782 = vmatpush2.bf16.msra.mxu0 %v1376
    %1783 = vmatprep.subr.bf16.mxu0 %v1373
    %1784 = vmatpush2.bf16.msra.mxu0 %v1372
    %1785 = vmatprep.subr.bf16.mxu0 %v1369
    %1786 = vmatpush2.bf16.msra.mxu0 %v1368
    %1787 = vmatprep.subr.bf16.mxu0 %v1365
    %1788 = vmatpush2.bf16.msra.mxu0 %v1364
    %1789 = vmatprep.subr.bf16.mxu0 %v1361
    %1790 = vmatpush2.bf16.msra.mxu0 %v1360
    %1791 = vmatprep.subr.bf16.mxu0 %v1357
    %1792 = vmatpush2.bf16.msra.mxu0 %v1356
    %1793 = vmatprep.subr.bf16.mxu0 %v1353
    %1794 = vmatpush2.bf16.msra.mxu0 %v1352
    %1795 = vmatprep.mubr.bf16.mxu0 %v351
    %1796 = vmatmul.mubr.bf16.gmra.mxu0 %v350
    %v1797 = vpop.f32.mrf.mxu0
    %v1798 = vadd.f32 %v1757, %v1797
    %v1799 = vpop.f32.mrf.mxu0
    %v1800 = vadd.f32 %v1759, %v1799
    %v1801 = vpop.f32.mrf.mxu0
    %v1802 = vpop.f32.mrf.mxu0
    %1803 = vdwg.mxu0
    %1804 = vmatprep.subr.bf16.mxu0 %v1159
    %1805 = vmatpush1.bf16.msra.mxu0 %v1158
    %1806 = vmatprep.subr.bf16.mxu0 %v1155
    %1807 = vmatpush1.bf16.msra.mxu0 %v1154
    %1808 = vmatprep.subr.bf16.mxu0 %v1151
    %1809 = vmatpush1.bf16.msra.mxu0 %v1150
    %1810 = vmatprep.subr.bf16.mxu0 %v1147
    %1811 = vmatpush1.bf16.msra.mxu0 %v1146
    %1812 = vmatprep.subr.bf16.mxu0 %v1143
    %1813 = vmatpush1.bf16.msra.mxu0 %v1142
    %1814 = vmatprep.subr.bf16.mxu0 %v1139
    %1815 = vmatpush1.bf16.msra.mxu0 %v1138
    %1816 = vmatprep.subr.bf16.mxu0 %v1135
    %1817 = vmatpush1.bf16.msra.mxu0 %v1134
    %1818 = vmatprep.subr.bf16.mxu0 %v1131
    %1819 = vmatpush1.bf16.msra.mxu0 %v1130
    %1820 = vmatprep.subr.bf16.mxu0 %v1191
    %1821 = vmatpush2.bf16.msra.mxu0 %v1190
    %1822 = vmatprep.subr.bf16.mxu0 %v1187
    %1823 = vmatpush2.bf16.msra.mxu0 %v1186
    %1824 = vmatprep.subr.bf16.mxu0 %v1183
    %1825 = vmatpush2.bf16.msra.mxu0 %v1182
    %1826 = vmatprep.subr.bf16.mxu0 %v1179
    %1827 = vmatpush2.bf16.msra.mxu0 %v1178
    %1828 = vmatprep.subr.bf16.mxu0 %v1175
    %1829 = vmatpush2.bf16.msra.mxu0 %v1174
    %1830 = vmatprep.subr.bf16.mxu0 %v1171
    %1831 = vmatpush2.bf16.msra.mxu0 %v1170
    %1832 = vmatprep.subr.bf16.mxu0 %v1167
    %1833 = vmatpush2.bf16.msra.mxu0 %v1166
    %1834 = vmatprep.subr.bf16.mxu0 %v1163
    %1835 = vmatpush2.bf16.msra.mxu0 %v1162
    %1836 = vmatprep.mubr.bf16.mxu0 %v345
    %1837 = vmatmul.mubr.bf16.gmra.mxu0 %v344
    %v1838 = vpop.f32.mrf.mxu0
    %v1839 = vadd.f32 %v323, %v1838
    %v1840 = vpop.f32.mrf.mxu0
    %v1841 = vadd.f32 %v327, %v1840
    %v1842 = vpop.f32.mrf.mxu0
    %v1843 = vpop.f32.mrf.mxu0
    %1844 = vdwg.mxu0
    %1845 = vmatprep.subr.bf16.mxu0 %v1223
    %1846 = vmatpush1.bf16.msra.mxu0 %v1222
    %1847 = vmatprep.subr.bf16.mxu0 %v1219
    %1848 = vmatpush1.bf16.msra.mxu0 %v1218
    %1849 = vmatprep.subr.bf16.mxu0 %v1215
    %1850 = vmatpush1.bf16.msra.mxu0 %v1214
    %1851 = vmatprep.subr.bf16.mxu0 %v1211
    %1852 = vmatpush1.bf16.msra.mxu0 %v1210
    %1853 = vmatprep.subr.bf16.mxu0 %v1207
    %1854 = vmatpush1.bf16.msra.mxu0 %v1206
    %1855 = vmatprep.subr.bf16.mxu0 %v1203
    %1856 = vmatpush1.bf16.msra.mxu0 %v1202
    %1857 = vmatprep.subr.bf16.mxu0 %v1199
    %1858 = vmatpush1.bf16.msra.mxu0 %v1198
    %1859 = vmatprep.subr.bf16.mxu0 %v1195
    %1860 = vmatpush1.bf16.msra.mxu0 %v1194
    %1861 = vmatprep.subr.bf16.mxu0 %v1255
    %1862 = vmatpush2.bf16.msra.mxu0 %v1254
    %1863 = vmatprep.subr.bf16.mxu0 %v1251
    %1864 = vmatpush2.bf16.msra.mxu0 %v1250
    %1865 = vmatprep.subr.bf16.mxu0 %v1247
    %1866 = vmatpush2.bf16.msra.mxu0 %v1246
    %1867 = vmatprep.subr.bf16.mxu0 %v1243
    %1868 = vmatpush2.bf16.msra.mxu0 %v1242
    %1869 = vmatprep.subr.bf16.mxu0 %v1239
    %1870 = vmatpush2.bf16.msra.mxu0 %v1238
    %1871 = vmatprep.subr.bf16.mxu0 %v1235
    %1872 = vmatpush2.bf16.msra.mxu0 %v1234
    %1873 = vmatprep.subr.bf16.mxu0 %v1231
    %1874 = vmatpush2.bf16.msra.mxu0 %v1230
    %1875 = vmatprep.subr.bf16.mxu0 %v1227
    %1876 = vmatpush2.bf16.msra.mxu0 %v1226
    %1877 = vmatprep.mubr.bf16.mxu0 %v347
    %1878 = vmatmul.mubr.bf16.gmra.mxu0 %v346
    %v1879 = vpop.f32.mrf.mxu0
    %v1880 = vadd.f32 %v1839, %v1879
    %v1881 = vpop.f32.mrf.mxu0
    %v1882 = vadd.f32 %v1841, %v1881
    %v1883 = vpop.f32.mrf.mxu0
    %v1884 = vpop.f32.mrf.mxu0
    %1885 = vdwg.mxu0
    %1886 = vmatprep.subr.bf16.mxu0 %v1287
    %1887 = vmatpush1.bf16.msra.mxu0 %v1286
    %1888 = vmatprep.subr.bf16.mxu0 %v1283
    %1889 = vmatpush1.bf16.msra.mxu0 %v1282
    %1890 = vmatprep.subr.bf16.mxu0 %v1279
    %1891 = vmatpush1.bf16.msra.mxu0 %v1278
    %1892 = vmatprep.subr.bf16.mxu0 %v1275
    %1893 = vmatpush1.bf16.msra.mxu0 %v1274
    %1894 = vmatprep.subr.bf16.mxu0 %v1271
    %1895 = vmatpush1.bf16.msra.mxu0 %v1270
    %1896 = vmatprep.subr.bf16.mxu0 %v1267
    %1897 = vmatpush1.bf16.msra.mxu0 %v1266
    %1898 = vmatprep.subr.bf16.mxu0 %v1263
    %1899 = vmatpush1.bf16.msra.mxu0 %v1262
    %1900 = vmatprep.subr.bf16.mxu0 %v1259
    %1901 = vmatpush1.bf16.msra.mxu0 %v1258
    %1902 = vmatprep.subr.bf16.mxu0 %v1319
    %1903 = vmatpush2.bf16.msra.mxu0 %v1318
    %1904 = vmatprep.subr.bf16.mxu0 %v1315
    %1905 = vmatpush2.bf16.msra.mxu0 %v1314
    %1906 = vmatprep.subr.bf16.mxu0 %v1311
    %1907 = vmatpush2.bf16.msra.mxu0 %v1310
    %1908 = vmatprep.subr.bf16.mxu0 %v1307
    %1909 = vmatpush2.bf16.msra.mxu0 %v1306
    %1910 = vmatprep.subr.bf16.mxu0 %v1303
    %1911 = vmatpush2.bf16.msra.mxu0 %v1302
    %1912 = vmatprep.subr.bf16.mxu0 %v1299
    %1913 = vmatpush2.bf16.msra.mxu0 %v1298
    %1914 = vmatprep.subr.bf16.mxu0 %v1295
    %1915 = vmatpush2.bf16.msra.mxu0 %v1294
    %1916 = vmatprep.subr.bf16.mxu0 %v1291
    %1917 = vmatpush2.bf16.msra.mxu0 %v1290
    %1918 = vmatprep.mubr.bf16.mxu0 %v349
    %1919 = vmatmul.mubr.bf16.gmra.mxu0 %v348
    %v1920 = vpop.f32.mrf.mxu0
    %v1921 = vadd.f32 %v1880, %v1920
    %v1922 = vpop.f32.mrf.mxu0
    %v1923 = vadd.f32 %v1882, %v1922
    %v1924 = vpop.f32.mrf.mxu0
    %v1925 = vpop.f32.mrf.mxu0
    %1926 = vdwg.mxu0
    %1927 = vmatprep.subr.bf16.mxu0 %v1351
    %1928 = vmatpush1.bf16.msra.mxu0 %v1350
    %1929 = vmatprep.subr.bf16.mxu0 %v1347
    %1930 = vmatpush1.bf16.msra.mxu0 %v1346
    %1931 = vmatprep.subr.bf16.mxu0 %v1343
    %1932 = vmatpush1.bf16.msra.mxu0 %v1342
    %1933 = vmatprep.subr.bf16.mxu0 %v1339
    %1934 = vmatpush1.bf16.msra.mxu0 %v1338
    %1935 = vmatprep.subr.bf16.mxu0 %v1335
    %1936 = vmatpush1.bf16.msra.mxu0 %v1334
    %1937 = vmatprep.subr.bf16.mxu0 %v1331
    %1938 = vmatpush1.bf16.msra.mxu0 %v1330
    %1939 = vmatprep.subr.bf16.mxu0 %v1327
    %1940 = vmatpush1.bf16.msra.mxu0 %v1326
    %1941 = vmatprep.subr.bf16.mxu0 %v1323
    %1942 = vmatpush1.bf16.msra.mxu0 %v1322
    %1943 = vmatprep.subr.bf16.mxu0 %v1383
    %1944 = vmatpush2.bf16.msra.mxu0 %v1382
    %1945 = vmatprep.subr.bf16.mxu0 %v1379
    %1946 = vmatpush2.bf16.msra.mxu0 %v1378
    %1947 = vmatprep.subr.bf16.mxu0 %v1375
    %1948 = vmatpush2.bf16.msra.mxu0 %v1374
    %1949 = vmatprep.subr.bf16.mxu0 %v1371
    %1950 = vmatpush2.bf16.msra.mxu0 %v1370
    %1951 = vmatprep.subr.bf16.mxu0 %v1367
    %1952 = vmatpush2.bf16.msra.mxu0 %v1366
    %1953 = vmatprep.subr.bf16.mxu0 %v1363
    %1954 = vmatpush2.bf16.msra.mxu0 %v1362
    %1955 = vmatprep.subr.bf16.mxu0 %v1359
    %1956 = vmatpush2.bf16.msra.mxu0 %v1358
    %1957 = vmatprep.subr.bf16.mxu0 %v1355
    %1958 = vmatpush2.bf16.msra.mxu0 %v1354
    %1959 = vmatprep.mubr.bf16.mxu0 %v351
    %1960 = vmatmul.mubr.bf16.gmra.mxu0 %v350
    %v1961 = vpop.f32.mrf.mxu0
    %v1962 = vadd.f32 %v1921, %v1961
    %v1963 = vpop.f32.mrf.mxu0
    %v1964 = vadd.f32 %v1923, %v1963
    %v1965 = vpop.f32.mrf.mxu0
    %v1966 = vpop.f32.mrf.mxu0
    %1967 = vdwg.mxu0
    %v1968 = vmax.f32 %v1798, 0.0
    %v1969 = vmax.f32 %v1800, 0.0
    %v1970 = vmax.f32 %v1962, 0.0
    %v1971 = vmax.f32 %v1964, 0.0
    %v1972 = vpack.c.bf16 %v1968, %v1968
    %v1973 = vpack.c.bf16 %v1969, %v1969
    %v1974 = vpack.c.bf16 %v1970, %v1970
    %v1975 = vpack.c.bf16 %v1971, %v1971
    %v1976 = vld [vmem:[#allocation5] sm:$0xf]
    %v1977 = vld [vmem:[#allocation5 + $0x4] sm:$0xf]
    %v1978 = vld [vmem:[#allocation5 + $0x8] sm:$0xf]
    %v1979 = vld [vmem:[#allocation5 + $0xc] sm:$0xf]
    %v1980 = vld [vmem:[#allocation5 + $0x10] sm:$0xf]
    %v1981 = vld [vmem:[#allocation5 + $0x14] sm:$0xf]
    %v1982 = vld [vmem:[#allocation5 + $0x18] sm:$0xf]
    %v1983 = vld [vmem:[#allocation5 + $0x1c] sm:$0xf]
    %v1984 = vld [vmem:[#allocation5 + $0x20] sm:$0xf]
    %v1985 = vld [vmem:[#allocation5 + $0x24] sm:$0xf]
    %v1986 = vld [vmem:[#allocation5 + $0x28] sm:$0xf]
    %v1987 = vld [vmem:[#allocation5 + $0x2c] sm:$0xf]
    %v1988 = vld [vmem:[#allocation5 + $0x30] sm:$0xf]
    %v1989 = vld [vmem:[#allocation5 + $0x34] sm:$0xf]
    %v1990 = vld [vmem:[#allocation5 + $0x38] sm:$0xf]
    %v1991 = vld [vmem:[#allocation5 + $0x3c] sm:$0xf]
    %v1992 = vld [vmem:[#allocation5 + $0x40] sm:$0xf]
    %v1993 = vld [vmem:[#allocation5 + $0x44] sm:$0xf]
    %v1994 = vld [vmem:[#allocation5 + $0x48] sm:$0xf]
    %v1995 = vld [vmem:[#allocation5 + $0x4c] sm:$0xf]
    %v1996 = vld [vmem:[#allocation5 + $0x50] sm:$0xf]
    %v1997 = vld [vmem:[#allocation5 + $0x54] sm:$0xf]
    %v1998 = vld [vmem:[#allocation5 + $0x58] sm:$0xf]
    %v1999 = vld [vmem:[#allocation5 + $0x5c] sm:$0xf]
    %v2000 = vld [vmem:[#allocation5 + $0x60] sm:$0xf]
    %v2001 = vld [vmem:[#allocation5 + $0x64] sm:$0xf]
    %v2002 = vld [vmem:[#allocation5 + $0x68] sm:$0xf]
    %v2003 = vld [vmem:[#allocation5 + $0x6c] sm:$0xf]
    %v2004 = vld [vmem:[#allocation5 + $0x70] sm:$0xf]
    %v2005 = vld [vmem:[#allocation5 + $0x74] sm:$0xf]
    %v2006 = vld [vmem:[#allocation5 + $0x78] sm:$0xf]
    %v2007 = vld [vmem:[#allocation5 + $0x7c] sm:$0xf]
    %v2008 = vld [vmem:[#allocation5 + $0x80] sm:$0xf]
    %v2009 = vld [vmem:[#allocation5 + $0x84] sm:$0xf]
    %v2010 = vld [vmem:[#allocation5 + $0x88] sm:$0xf]
    %v2011 = vld [vmem:[#allocation5 + $0x8c] sm:$0xf]
    %v2012 = vld [vmem:[#allocation5 + $0x90] sm:$0xf]
    %v2013 = vld [vmem:[#allocation5 + $0x94] sm:$0xf]
    %v2014 = vld [vmem:[#allocation5 + $0x98] sm:$0xf]
    %v2015 = vld [vmem:[#allocation5 + $0x9c] sm:$0xf]
    %v2016 = vld [vmem:[#allocation5 + $0xa0] sm:$0xf]
    %v2017 = vld [vmem:[#allocation5 + $0xa4] sm:$0xf]
    %v2018 = vld [vmem:[#allocation5 + $0xa8] sm:$0xf]
    %v2019 = vld [vmem:[#allocation5 + $0xac] sm:$0xf]
    %v2020 = vld [vmem:[#allocation5 + $0xb0] sm:$0xf]
    %v2021 = vld [vmem:[#allocation5 + $0xb4] sm:$0xf]
    %v2022 = vld [vmem:[#allocation5 + $0xb8] sm:$0xf]
    %v2023 = vld [vmem:[#allocation5 + $0xbc] sm:$0xf]
    %v2024 = vld [vmem:[#allocation5 + $0xc0] sm:$0xf]
    %v2025 = vld [vmem:[#allocation5 + $0xc4] sm:$0xf]
    %v2026 = vld [vmem:[#allocation5 + $0xc8] sm:$0xf]
    %v2027 = vld [vmem:[#allocation5 + $0xcc] sm:$0xf]
    %v2028 = vld [vmem:[#allocation5 + $0xd0] sm:$0xf]
    %v2029 = vld [vmem:[#allocation5 + $0xd4] sm:$0xf]
    %v2030 = vld [vmem:[#allocation5 + $0xd8] sm:$0xf]
    %v2031 = vld [vmem:[#allocation5 + $0xdc] sm:$0xf]
    %v2032 = vld [vmem:[#allocation5 + $0xe0] sm:$0xf]
    %v2033 = vld [vmem:[#allocation5 + $0xe4] sm:$0xf]
    %v2034 = vld [vmem:[#allocation5 + $0xe8] sm:$0xf]
    %v2035 = vld [vmem:[#allocation5 + $0xec] sm:$0xf]
    %v2036 = vld [vmem:[#allocation5 + $0xf0] sm:$0xf]
    %v2037 = vld [vmem:[#allocation5 + $0xf4] sm:$0xf]
    %v2038 = vld [vmem:[#allocation5 + $0xf8] sm:$0xf]
    %v2039 = vld [vmem:[#allocation5 + $0xfc] sm:$0xf]
    %v2040 = vld [vmem:[%s4] sm:$0x1]
    %v2042 = vlaneseq
    %v2043 = vshrl.u32 %v2042, 7
    %v2044 = vsub.s32 0, %v2043
    %v2045 = vrot.slane %v2040, %v2044
    %v2111 = vunpack.c.l.b16 %v1976
    %v2112 = vunpack.c.l.b16 %v1977
    %v2113 = vunpack.c.l.b16 %v1978
    %v2114 = vunpack.c.l.b16 %v1979
    %v2115 = vunpack.c.l.b16 %v1980
    %v2116 = vunpack.c.l.b16 %v1981
    %v2117 = vunpack.c.l.b16 %v1982
    %v2118 = vunpack.c.l.b16 %v1983
    %v2119 = vunpack.c.l.b16 %v1984
    %v2120 = vunpack.c.l.b16 %v1985
    %v2121 = vunpack.c.l.b16 %v1986
    %v2122 = vunpack.c.l.b16 %v1987
    %v2123 = vunpack.c.l.b16 %v1988
    %v2124 = vunpack.c.l.b16 %v1989
    %v2125 = vunpack.c.l.b16 %v1990
    %v2126 = vunpack.c.l.b16 %v1991
    %v2127 = vunpack.c.l.b16 %v1992
    %v2128 = vunpack.c.l.b16 %v1993
    %v2129 = vunpack.c.l.b16 %v1994
    %v2130 = vunpack.c.l.b16 %v1995
    %v2131 = vunpack.c.l.b16 %v1996
    %v2132 = vunpack.c.l.b16 %v1997
    %v2133 = vunpack.c.l.b16 %v1998
    %v2134 = vunpack.c.l.b16 %v1999
    %v2135 = vunpack.c.l.b16 %v2000
    %v2136 = vunpack.c.l.b16 %v2001
    %v2137 = vunpack.c.l.b16 %v2002
    %v2138 = vunpack.c.l.b16 %v2003
    %v2139 = vunpack.c.l.b16 %v2004
    %v2140 = vunpack.c.l.b16 %v2005
    %v2141 = vunpack.c.l.b16 %v2006
    %v2142 = vunpack.c.l.b16 %v2007
    %v2143 = vunpack.c.l.b16 %v2008
    %v2144 = vunpack.c.l.b16 %v2009
    %v2145 = vunpack.c.l.b16 %v2010
    %v2146 = vunpack.c.l.b16 %v2011
    %v2147 = vunpack.c.l.b16 %v2012
    %v2148 = vunpack.c.l.b16 %v2013
    %v2149 = vunpack.c.l.b16 %v2014
    %v2150 = vunpack.c.l.b16 %v2015
    %v2151 = vunpack.c.l.b16 %v2016
    %v2152 = vunpack.c.l.b16 %v2017
    %v2153 = vunpack.c.l.b16 %v2018
    %v2154 = vunpack.c.l.b16 %v2019
    %v2155 = vunpack.c.l.b16 %v2020
    %v2156 = vunpack.c.l.b16 %v2021
    %v2157 = vunpack.c.l.b16 %v2022
    %v2158 = vunpack.c.l.b16 %v2023
    %v2159 = vunpack.c.l.b16 %v2024
    %v2160 = vunpack.c.l.b16 %v2025
    %v2161 = vunpack.c.l.b16 %v2026
    %v2162 = vunpack.c.l.b16 %v2027
    %v2163 = vunpack.c.l.b16 %v2028
    %v2164 = vunpack.c.l.b16 %v2029
    %v2165 = vunpack.c.l.b16 %v2030
    %v2166 = vunpack.c.l.b16 %v2031
    %v2167 = vunpack.c.l.b16 %v2032
    %v2168 = vunpack.c.l.b16 %v2033
    %v2169 = vunpack.c.l.b16 %v2034
    %v2170 = vunpack.c.l.b16 %v2035
    %v2171 = vunpack.c.l.b16 %v2036
    %v2172 = vunpack.c.l.b16 %v2037
    %v2173 = vunpack.c.l.b16 %v2038
    %v2174 = vunpack.c.l.b16 %v2039
    %v2175 = vpack.c.b16 %v2112, %v2111
    %v2176 = vpack.c.b16 %v2114, %v2113
    %v2177 = vpack.c.b16 %v2116, %v2115
    %v2178 = vpack.c.b16 %v2118, %v2117
    %v2179 = vpack.c.b16 %v2120, %v2119
    %v2180 = vpack.c.b16 %v2122, %v2121
    %v2181 = vpack.c.b16 %v2124, %v2123
    %v2182 = vpack.c.b16 %v2126, %v2125
    %v2183 = vpack.c.b16 %v2128, %v2127
    %v2184 = vpack.c.b16 %v2130, %v2129
    %v2185 = vpack.c.b16 %v2132, %v2131
    %v2186 = vpack.c.b16 %v2134, %v2133
    %v2187 = vpack.c.b16 %v2136, %v2135
    %v2188 = vpack.c.b16 %v2138, %v2137
    %v2189 = vpack.c.b16 %v2140, %v2139
    %v2190 = vpack.c.b16 %v2142, %v2141
    %v2191 = vpack.c.b16 %v2144, %v2143
    %v2192 = vpack.c.b16 %v2146, %v2145
    %v2193 = vpack.c.b16 %v2148, %v2147
    %v2194 = vpack.c.b16 %v2150, %v2149
    %v2195 = vpack.c.b16 %v2152, %v2151
    %v2196 = vpack.c.b16 %v2154, %v2153
    %v2197 = vpack.c.b16 %v2156, %v2155
    %v2198 = vpack.c.b16 %v2158, %v2157
    %v2199 = vpack.c.b16 %v2160, %v2159
    %v2200 = vpack.c.b16 %v2162, %v2161
    %v2201 = vpack.c.b16 %v2164, %v2163
    %v2202 = vpack.c.b16 %v2166, %v2165
    %v2203 = vpack.c.b16 %v2168, %v2167
    %v2204 = vpack.c.b16 %v2170, %v2169
    %v2205 = vpack.c.b16 %v2172, %v2171
    %v2206 = vpack.c.b16 %v2174, %v2173
    %2239 = vmatprep.subr.bf16.mxu0 0
    %2240 = vmatpush1.bf16.msra.mxu0 %v2182
    %2241 = vmatprep.subr.bf16.mxu0 0
    %2242 = vmatpush1.bf16.msra.mxu0 %v2181
    %2243 = vmatprep.subr.bf16.mxu0 0
    %2244 = vmatpush1.bf16.msra.mxu0 %v2180
    %2245 = vmatprep.subr.bf16.mxu0 0
    %2246 = vmatpush1.bf16.msra.mxu0 %v2179
    %2247 = vmatprep.subr.bf16.mxu0 0
    %2248 = vmatpush1.bf16.msra.mxu0 %v2178
    %2249 = vmatprep.subr.bf16.mxu0 0
    %2250 = vmatpush1.bf16.msra.mxu0 %v2177
    %2251 = vmatprep.subr.bf16.mxu0 0
    %2252 = vmatpush1.bf16.msra.mxu0 %v2176
    %2253 = vmatprep.subr.bf16.mxu0 0
    %2254 = vmatpush1.bf16.msra.mxu0 %v2175
    %2255 = vmatprep.subr.bf16.mxu0 0
    %2256 = vmatpush2.bf16.msra.mxu0 %v2190
    %2257 = vmatprep.subr.bf16.mxu0 0
    %2258 = vmatpush2.bf16.msra.mxu0 %v2189
    %2259 = vmatprep.subr.bf16.mxu0 0
    %2260 = vmatpush2.bf16.msra.mxu0 %v2188
    %2261 = vmatprep.subr.bf16.mxu0 0
    %2262 = vmatpush2.bf16.msra.mxu0 %v2187
    %2263 = vmatprep.subr.bf16.mxu0 0
    %2264 = vmatpush2.bf16.msra.mxu0 %v2186
    %2265 = vmatprep.subr.bf16.mxu0 0
    %2266 = vmatpush2.bf16.msra.mxu0 %v2185
    %2267 = vmatprep.subr.bf16.mxu0 0
    %2268 = vmatpush2.bf16.msra.mxu0 %v2184
    %2269 = vmatprep.subr.bf16.mxu0 0
    %2270 = vmatpush2.bf16.msra.mxu0 %v2183
    %2271 = vmatprep.mubr.bf16.mxu0 %v1973
    %2272 = vmatmul.mubr.bf16.gmra.mxu0 %v1972
    %v2273 = vpop.f32.mrf.mxu0
    %v2274 = vadd.f32 %v2045, %v2273
    %v2275 = vpop.f32.mrf.mxu0
    %v2276 = vpop.f32.mrf.mxu0
    %v2277 = vpop.f32.mrf.mxu0
    %2278 = vdwg.mxu0
    %2279 = vmatprep.subr.bf16.mxu0 0
    %2280 = vmatpush1.bf16.msra.mxu0 %v2198
    %2281 = vmatprep.subr.bf16.mxu0 0
    %2282 = vmatpush1.bf16.msra.mxu0 %v2197
    %2283 = vmatprep.subr.bf16.mxu0 0
    %2284 = vmatpush1.bf16.msra.mxu0 %v2196
    %2285 = vmatprep.subr.bf16.mxu0 0
    %2286 = vmatpush1.bf16.msra.mxu0 %v2195
    %2287 = vmatprep.subr.bf16.mxu0 0
    %2288 = vmatpush1.bf16.msra.mxu0 %v2194
    %2289 = vmatprep.subr.bf16.mxu0 0
    %2290 = vmatpush1.bf16.msra.mxu0 %v2193
    %2291 = vmatprep.subr.bf16.mxu0 0
    %2292 = vmatpush1.bf16.msra.mxu0 %v2192
    %2293 = vmatprep.subr.bf16.mxu0 0
    %2294 = vmatpush1.bf16.msra.mxu0 %v2191
    %2295 = vmatprep.subr.bf16.mxu0 0
    %2296 = vmatpush2.bf16.msra.mxu0 %v2206
    %2297 = vmatprep.subr.bf16.mxu0 0
    %2298 = vmatpush2.bf16.msra.mxu0 %v2205
    %2299 = vmatprep.subr.bf16.mxu0 0
    %2300 = vmatpush2.bf16.msra.mxu0 %v2204
    %2301 = vmatprep.subr.bf16.mxu0 0
    %2302 = vmatpush2.bf16.msra.mxu0 %v2203
    %2303 = vmatprep.subr.bf16.mxu0 0
    %2304 = vmatpush2.bf16.msra.mxu0 %v2202
    %2305 = vmatprep.subr.bf16.mxu0 0
    %2306 = vmatpush2.bf16.msra.mxu0 %v2201
    %2307 = vmatprep.subr.bf16.mxu0 0
    %2308 = vmatpush2.bf16.msra.mxu0 %v2200
    %2309 = vmatprep.subr.bf16.mxu0 0
    %2310 = vmatpush2.bf16.msra.mxu0 %v2199
    %2311 = vmatprep.mubr.bf16.mxu0 %v1975
    %2312 = vmatmul.mubr.bf16.gmra.mxu0 %v1974
    %v2313 = vpop.f32.mrf.mxu0
    %v2314 = vadd.f32 %v2274, %v2313
    %v2315 = vpop.f32.mrf.mxu0
    %v2316 = vpop.f32.mrf.mxu0
    %v2317 = vpop.f32.mrf.mxu0
    %2318 = vdwg.mxu0
    %2319 = vst [vmem:[#allocation7] sm:$0xff] %v2314
    // Predicated region
    $region30: #{ssl_forward.1} parent=1 // pred_check
      _
    $region31: #{ssl_forward.1} parent=1 // pred_check_branch
      %2321 = sbr.rel (0) target = $region33
    $region32: #{ssl_forward.1} parent=1 // pred_region
      %s2323 = ssub.s32 128, 128
      %2324 = vsyncadd [#allocation4], %s2323
      %s2326 = sshll.u32 [#allocation7], 4
      %s2327 = int_to_ptr.vmem [resolvable:$true] %s2326
      %2329 = dma.vmem_to_hbm [thread:$0]  %s2327, 128, %s5, [#allocation4]
    $region33: #{ssl_forward.1} parent=1 // pred_fallthru
      _
    // Predicated region
    $region34: #{ssl_forward.1} parent=1 // pred_check
      _
    $region35: #{ssl_forward.1} parent=1 // pred_check_branch
      %2331 = sbr.rel (0) target = $region37
    $region36: #{ssl_forward.1} parent=1 // pred_region
      %2332 = dma.done [#allocation4], 128
    $region37: #{ssl_forward.1} parent=1 // pred_fallthru
      _
    %2333 = vsyncpa [#allocation3], 1
    %2334 = vsyncpa [#allocation6], 1
    %2335 = vsyncpa [#allocation4], 1

</llo_original>
